<compile_context>
chip_gen: v6e
topology: v6e:2x2x1
jax: 0.10.0
libtpu: 0.0.40
codegen_flags: <defaults>
</compile_context>

<pallas_src>
import jax
import jax.numpy as jnp
from jax import lax
from jax.experimental import pallas as pl
from jax.experimental.pallas import tpu as pltpu

HIDDEN = 64
NEG_SLOPE = 0.01   # leaky_relu / GATConv negative slope used by AttentiveFP


def _leaky(x, slope=NEG_SLOPE):
    return jnp.where(x > 0, x, slope * x)


def _elu(x):
    return jnp.where(x > 0, x, jnp.exp(jnp.minimum(x, 0.0)) - 1.0)


def _sigmoid(x):
    return 1.0 / (1.0 + jnp.exp(-x))


def _gru_fused(inp, hid, w, b):
    """PyTorch GRUCell with a single fused gate matmul.

    w: [2H, 4H], row blocks = [input-rows ; hidden-rows],
       column blocks = [r | z | n_from_input | n_from_hidden].
    b: [1, 4H] = [b_ih_r+b_hh_r | b_ih_z+b_hh_z | b_ih_n | b_hh_n].
    """
    H = HIDDEN
    cat = jnp.concatenate([inp, hid], axis=-1)                         # [*, 2H]
    g = jnp.dot(cat, w, preferred_element_type=jnp.float32) + b        # [*, 4H]
    r = _sigmoid(g[:, 0:H])
    z = _sigmoid(g[:, H:2 * H])
    n = jnp.tanh(g[:, 2 * H:3 * H] + r * g[:, 3 * H:4 * H])
    return (1.0 - z) * n + z * hid


def attentivefp_kernel(
    node_attr_ref, edge_attr_ref, edge_idx_ref,
    w_lin1_t_ref, b_lin1_ref,
    att_l_ref, att_r_ref, w_gate_x_t_ref, w_gate_e_ref, w_gate2_t_ref, b_gate_ref,
    w_gru1_ref, b_gru1_ref,
    w_mol_t_ref, att_src_ref, att_dst_ref, b_mol_ref,
    w_gru2_ref, b_gru2_ref,
    w_fc_t_ref, b_fc_ref,
    out_ref,
):
    node_attr = node_attr_ref[...]          # [N, 1]
    edge_attr = edge_attr_ref[...]          # [E, 1]
    ei = edge_idx_ref[...]                  # [2E, 1] int32: [src ; dst]

    two_e = ei.shape[0]
    E = two_e // 2
    N = node_attr.shape[0]

    # ---- build one-hot incidence rows in-kernel (no [E,N] HBM traffic) -----
    lane_ids = lax.broadcasted_iota(jnp.int32, (two_e, N), 1)
    oh = (lane_ids == ei).astype(jnp.float32)        # [2E, N]; rows 0:E = src, E:2E = dst
    dst_oh = oh[E:, :]                               # [E, N]

    # ---- lin1 + leaky_relu (rank-1 contraction -> VPU broadcast, not MXU) --
    x = _leaky(node_attr * w_lin1_t_ref[...] + b_lin1_ref[...])        # [N, H]

    # ---- GATEConv (edge attention, aggr='add') -----------------------------
    # fused gather of source and target node features: one [2E,N]@[N,H] matmul
    xg = jnp.dot(oh, x, preferred_element_type=jnp.float32)            # [2E, H]
    x_j = xg[:E, :]                                                    # sources
    x_i = xg[E:, :]                                                    # targets

    # GATEConv lin1 on concat([x_j, edge_attr]) split into x-part + edge-part
    m = _leaky(jnp.dot(x_j, w_gate_x_t_ref[...], preferred_element_type=jnp.float32)
               + edge_attr * w_gate_e_ref[...])                        # [E, H]

    alpha = _leaky(jnp.sum(m * att_l_ref[...], axis=-1, keepdims=True)
                   + jnp.sum(x_i * att_r_ref[...], axis=-1, keepdims=True))   # [E, 1]

    # segment softmax over edges grouped by target node (global-max shift is
    # mathematically identical to the per-segment shift)
    exp_a = jnp.exp(alpha - jnp.max(alpha))                            # [E, 1]
    denom_node = lax.dot_general(                                      # [N, 1]
        dst_oh, exp_a, (((0,), (0,)), ((), ())),
        preferred_element_type=jnp.float32)
    denom_edge = jnp.dot(dst_oh, denom_node,
                         preferred_element_type=jnp.float32) + 1e-16   # [E, 1]
    alpha_n = exp_a / denom_edge                                       # [E, 1]

    msg = jnp.dot(m, w_gate2_t_ref[...],
                  preferred_element_type=jnp.float32) * alpha_n        # [E, H]
    # scatter-add: contract the edge axis of dst_oh (no transposed copy needed)
    h = lax.dot_general(dst_oh, msg, (((0,), (0,)), ((), ())),
                        preferred_element_type=jnp.float32) + b_gate_ref[...]  # [N, H]
    h = _elu(h)

    # ---- node GRU + relu (single fused gate matmul, K = 2H) ----------------
    x = jnp.maximum(_gru_fused(h, x, w_gru1_ref[...], b_gru1_ref[...]), 0.0)   # [N, H]

    # ---- molecule embedding: global_add_pool + relu ------------------------
    out = jnp.maximum(jnp.sum(x, axis=0, keepdims=True), 0.0)          # [1, H]

    # ---- mol GATConv (bipartite (x, out), all edges point to graph 0) ------
    xo = jnp.concatenate([x, out], axis=0)                             # [N+1, H]
    xo_t = jnp.dot(xo, w_mol_t_ref[...], preferred_element_type=jnp.float32)   # [N+1, H]
    x_t = xo_t[:N, :]
    out_t = xo_t[N:, :]
    a2 = _leaky(jnp.sum(x_t * att_src_ref[...], axis=-1, keepdims=True)
                + jnp.sum(out_t * att_dst_ref[...], axis=-1, keepdims=True))   # [N, 1]
    e2 = jnp.exp(a2 - jnp.max(a2))
    alpha2 = e2 / (jnp.sum(e2) + 1e-16)                                # [N, 1]
    h_mol = _elu(jnp.sum(alpha2 * x_t, axis=0, keepdims=True) + b_mol_ref[...])  # [1, H]

    # ---- mol GRU + relu ----------------------------------------------------
    out = jnp.maximum(_gru_fused(h_mol, out, w_gru2_ref[...], b_gru2_ref[...]), 0.0)  # [1, H]

    # ---- lin2 --------------------------------------------------------------
    out_ref[...] = jnp.dot(out, w_fc_t_ref[...],
                           preferred_element_type=jnp.float32) + b_fc_ref[...]


# Raw (unfused) parameter set — same layout as the PyTorch module, pre-transposed.
PARAM_ORDER = [
    "w_lin1_t", "b_lin1",
    "att_l", "att_r", "w_gate_x_t", "w_gate_e", "w_gate2_t", "b_gate",
    "w_ih_t", "w_hh_t", "b_ih", "b_hh",
    "w_mol_t", "att_src", "att_dst", "b_mol",
    "w_mih_t", "w_mhh_t", "b_mih", "b_mhh",
    "w_fc_t", "b_fc",
]


def make_params(key):
    H = HIDDEN
    ks = jax.random.split(key, len(PARAM_ORDER))
    shapes = {
        "w_lin1_t": (1, H), "b_lin1": (1, H),
        "att_l": (1, H), "att_r": (1, H),
        "w_gate_x_t": (H, H), "w_gate_e": (1, H), "w_gate2_t": (H, H), "b_gate": (1, H),
        "w_ih_t": (H, 3 * H), "w_hh_t": (H, 3 * H), "b_ih": (1, 3 * H), "b_hh": (1, 3 * H),
        "w_mol_t": (H, H), "att_src": (1, H), "att_dst": (1, H), "b_mol": (1, H),
        "w_mih_t": (H, 3 * H), "w_mhh_t": (H, 3 * H), "b_mih": (1, 3 * H), "b_mhh": (1, 3 * H),
        "w_fc_t": (H, H), "b_fc": (1, H),
    }
    return {name: 0.1 * jax.random.normal(k, shapes[name], dtype=jnp.float32)
            for name, k in zip(PARAM_ORDER, ks)}


def _fuse_gru(w_ih_t, w_hh_t, b_ih, b_hh):
    """Host-side GRU weight fusion -> single [2H,4H] matmul per GRUCell."""
    H = HIDDEN
    zeros = jnp.zeros((H, H), jnp.float32)
    w = jnp.concatenate([
        jnp.concatenate([w_ih_t[:, :2 * H], w_hh_t[:, :2 * H]], axis=0),   # r | z  (summed)
        jnp.concatenate([w_ih_t[:, 2 * H:], zeros], axis=0),               # n (input part)
        jnp.concatenate([zeros, w_hh_t[:, 2 * H:]], axis=0),               # n (hidden part)
    ], axis=1)                                                             # [2H, 4H]
    b = jnp.concatenate([b_ih[:, :2 * H] + b_hh[:, :2 * H],
                         b_ih[:, 2 * H:], b_hh[:, 2 * H:]], axis=1)        # [1, 4H]
    return w, b


def attentivefp_forward(node_attr, edge_index, edge_attr, params):
    H = HIDDEN
    N = node_attr.shape[0]
    E = edge_index.shape[1]

    # edge list as a single [2E, 1] int32 column: [src rows ; dst rows]
    edge_idx = jnp.concatenate(
        [edge_index[0], edge_index[1]], axis=0).astype(jnp.int32).reshape(2 * E, 1)

    # one-time host-side GRU weight fusion
    w_gru1, b_gru1 = _fuse_gru(params["w_ih_t"], params["w_hh_t"],
                               params["b_ih"], params["b_hh"])
    w_gru2, b_gru2 = _fuse_gru(params["w_mih_t"], params["w_mhh_t"],
                               params["b_mih"], params["b_mhh"])

    inputs = [
        node_attr.astype(jnp.float32),
        edge_attr.astype(jnp.float32),
        edge_idx,
        params["w_lin1_t"], params["b_lin1"],
        params["att_l"], params["att_r"], params["w_gate_x_t"], params["w_gate_e"],
        params["w_gate2_t"], params["b_gate"],
        w_gru1, b_gru1,
        params["w_mol_t"], params["att_src"], params["att_dst"], params["b_mol"],
        w_gru2, b_gru2,
        params["w_fc_t"], params["b_fc"],
    ]

    total_bytes = sum(int(a.size) * a.dtype.itemsize for a in inputs)
    out_bytes = H * 4
    flops = 2 * (
        2 * E * N * H          # fused src/dst gather
        + E * H * H            # GATEConv lin1 (x part)
        + E * H * H            # GATEConv lin2
        + 2 * E * N            # segment-softmax denominators
        + E * N * H            # scatter-add
        + N * 2 * H * 4 * H    # node GRU (fused)
        + (N + 1) * H * H      # mol attention lin
        + 2 * H * 4 * H        # mol GRU (fused)
        + H * H                # fc
    )
    transcendentals = 2 * E + N + 8 * N * H + 8 * H
    cost = pl.CostEstimate(flops=int(flops),
                           transcendentals=int(transcendentals),
                           bytes_accessed=int(total_bytes + out_bytes))

    vmem_limit = int(min(64 * 2 ** 20, max(32 * 2 ** 20, 4 * total_bytes)))

    vmem_spec = pl.BlockSpec(memory_space=pltpu.MemorySpace.VMEM)
    return pl.pallas_call(
        attentivefp_kernel,
        out_shape=jax.ShapeDtypeStruct((1, H), jnp.float32),
        in_specs=[vmem_spec] * len(inputs),
        out_specs=vmem_spec,
        compiler_params=pltpu.CompilerParams(vmem_limit_bytes=vmem_limit),
        cost_estimate=cost,
    )(*inputs)


# ---------------- pure-JAX reference (for correctness check) ----------------
def reference_forward(node_attr, edge_index, edge_attr, p):
    H = HIDDEN
    N = node_attr.shape[0]
    src, dst = edge_index[0], edge_index[1]

    def gru(inp, hid, w_ih_t, w_hh_t, b_ih, b_hh):
        gi = inp @ w_ih_t + b_ih
        gh = hid @ w_hh_t + b_hh
        r = jax.nn.sigmoid(gi[:, :H] + gh[:, :H])
        z = jax.nn.sigmoid(gi[:, H:2 * H] + gh[:, H:2 * H])
        n = jnp.tanh(gi[:, 2 * H:] + r * gh[:, 2 * H:])
        return (1 - z) * n + z * hid

    x = _leaky(node_attr @ p["w_lin1_t"] + p["b_lin1"])
    x_j, x_i = x[src], x[dst]
    m = _leaky(x_j @ p["w_gate_x_t"] + edge_attr * p["w_gate_e"])
    a = _leaky(jnp.sum(m * p["att_l"], -1, keepdims=True)
               + jnp.sum(x_i * p["att_r"], -1, keepdims=True))
    ea = jnp.exp(a - a.max())
    denom = jnp.zeros((N, 1)).at[dst].add(ea) + 1e-16
    alpha = ea / denom[dst]
    msg = (m @ p["w_gate2_t"]) * alpha
    h = _elu(jnp.zeros((N, H)).at[dst].add(msg) + p["b_gate"])
    x = jnp.maximum(gru(h, x, p["w_ih_t"], p["w_hh_t"], p["b_ih"], p["b_hh"]), 0.0)

    out = jnp.maximum(x.sum(0, keepdims=True), 0.0)
    x_t = x @ p["w_mol_t"]
    out_t = out @ p["w_mol_t"]
    a2 = _leaky(jnp.sum(x_t * p["att_src"], -1, keepdims=True)
                + jnp.sum(out_t * p["att_dst"], -1, keepdims=True))
    e2 = jnp.exp(a2 - a2.max())
    alpha2 = e2 / (e2.sum() + 1e-16)
    h_mol = _elu(jnp.sum(alpha2 * x_t, 0, keepdims=True) + p["b_mol"])
    out = jnp.maximum(gru(h_mol, out, p["w_mih_t"], p["w_mhh_t"], p["b_mih"], p["b_mhh"]), 0.0)
    return out @ p["w_fc_t"] + p["b_fc"]


if __name__ == "__main__":
    key = jax.random.PRNGKey(0)
    k_node, k_edge, k_src, k_dst, k_param = jax.random.split(key, 5)

    N, E = 8, 16  # small synthetic graph (single graph, batch all zeros)
    node_attr = jax.random.normal(k_node, (N, 1), dtype=jnp.float32)
    edge_attr = jax.random.normal(k_edge, (E, 1), dtype=jnp.float32)
    edge_index = jnp.stack([
        jax.random.randint(k_src, (E,), 0, N),
        jax.random.randint(k_dst, (E,), 0, N),
    ], axis=0).astype(jnp.int32)

    params = make_params(k_param)

    out = attentivefp_forward(node_attr, edge_index, edge_attr, params)
    out = jax.block_until_ready(out)

    ref = reference_forward(node_attr, edge_index, edge_attr, params)
    assert out.shape == (1, HIDDEN)
    assert jnp.allclose(out, ref, rtol=1e-4, atol=1e-4), (out, ref)
    print("KERNEL_OK")
</pallas_src>

<mosaic_0001>
module attributes {stable_mosaic.version = 11 : i64} {
  func.func @attentivefp_kernel(%arg0: memref<8x1xf32, #tpu.memory_space<vmem>>, %arg1: memref<16x1xf32, #tpu.memory_space<vmem>>, %arg2: memref<32x1xi32, #tpu.memory_space<vmem>>, %arg3: memref<1x64xf32, #tpu.memory_space<vmem>>, %arg4: memref<1x64xf32, #tpu.memory_space<vmem>>, %arg5: memref<1x64xf32, #tpu.memory_space<vmem>>, %arg6: memref<1x64xf32, #tpu.memory_space<vmem>>, %arg7: memref<64x64xf32, #tpu.memory_space<vmem>>, %arg8: memref<1x64xf32, #tpu.memory_space<vmem>>, %arg9: memref<64x64xf32, #tpu.memory_space<vmem>>, %arg10: memref<1x64xf32, #tpu.memory_space<vmem>>, %arg11: memref<128x256xf32, #tpu.memory_space<vmem>>, %arg12: memref<1x256xf32, #tpu.memory_space<vmem>>, %arg13: memref<64x64xf32, #tpu.memory_space<vmem>>, %arg14: memref<1x64xf32, #tpu.memory_space<vmem>>, %arg15: memref<1x64xf32, #tpu.memory_space<vmem>>, %arg16: memref<1x64xf32, #tpu.memory_space<vmem>>, %arg17: memref<128x256xf32, #tpu.memory_space<vmem>>, %arg18: memref<1x256xf32, #tpu.memory_space<vmem>>, %arg19: memref<64x64xf32, #tpu.memory_space<vmem>>, %arg20: memref<1x64xf32, #tpu.memory_space<vmem>>, %arg21: memref<1x64xf32, #tpu.memory_space<vmem>>) attributes {dimension_semantics = [], scalar_prefetch = 0 : i64, scratch_operands = 0 : i64, tpu.core_type = #tpu.core_type<tc>} {
    %c0 = arith.constant 0 : index
    %c0_0 = arith.constant 0 : index
    %0 = vector.load %arg0[%c0, %c0_0] : memref<8x1xf32, #tpu.memory_space<vmem>>, vector<8x1xf32>
    %c0_1 = arith.constant 0 : index
    %c0_2 = arith.constant 0 : index
    %1 = vector.load %arg1[%c0_1, %c0_2] : memref<16x1xf32, #tpu.memory_space<vmem>>, vector<16x1xf32>
    %c0_3 = arith.constant 0 : index
    %c0_4 = arith.constant 0 : index
    %2 = vector.load %arg2[%c0_3, %c0_4] : memref<32x1xi32, #tpu.memory_space<vmem>>, vector<32x1xi32>
    %3 = tpu.iota {dimensions = array<i32: 1>} : vector<32x8xi32>
    %4 = vector.broadcast %2 : vector<32x1xi32> to vector<32x8xi32>
    %5 = arith.cmpi eq, %3, %4 : vector<32x8xi32>
    %6 = arith.extui %5 : vector<32x8xi1> to vector<32x8xi32>
    %7 = arith.sitofp %6 : vector<32x8xi32> to vector<32x8xf32>
    %8 = vector.extract_strided_slice %7 {offsets = [16, 0], sizes = [16, 8], strides = [1, 1]} : vector<32x8xf32> to vector<16x8xf32>
    %c0_5 = arith.constant 0 : index
    %c0_6 = arith.constant 0 : index
    %9 = vector.load %arg3[%c0_5, %c0_6] : memref<1x64xf32, #tpu.memory_space<vmem>>, vector<1x64xf32>
    %10 = vector.broadcast %0 : vector<8x1xf32> to vector<8x64xf32>
    %11 = vector.broadcast %9 : vector<1x64xf32> to vector<8x64xf32>
    %12 = arith.mulf %10, %11 : vector<8x64xf32>
    %c0_7 = arith.constant 0 : index
    %c0_8 = arith.constant 0 : index
    %13 = vector.load %arg4[%c0_7, %c0_8] : memref<1x64xf32, #tpu.memory_space<vmem>>, vector<1x64xf32>
    %14 = vector.broadcast %13 : vector<1x64xf32> to vector<8x64xf32>
    %15 = arith.addf %12, %14 : vector<8x64xf32>
    %cst = arith.constant 0.000000e+00 : f32
    %16 = vector.broadcast %cst : f32 to vector<8x64xf32>
    %17 = arith.cmpf ogt, %15, %16 : vector<8x64xf32>
    %cst_9 = arith.constant 0.00999999977 : f32
    %18 = vector.broadcast %cst_9 : f32 to vector<8x64xf32>
    %19 = arith.mulf %18, %15 : vector<8x64xf32>
    %20 = arith.select %17, %15, %19 : vector<8x64xi1>, vector<8x64xf32>
    %cst_10 = arith.constant dense<0.000000e+00> : vector<32x64xf32>
    %21 = tpu.matmul %7, %20, %cst_10 {dimension_numbers = #tpu.dot_dimension_numbers<[1], [0], [0], [1], [0, 0, 1, 1], [], []>} : vector<32x8xf32>, vector<8x64xf32>, vector<32x64xf32> -> vector<32x64xf32>
    %22 = vector.extract_strided_slice %21 {offsets = [0, 0], sizes = [16, 64], strides = [1, 1]} : vector<32x64xf32> to vector<16x64xf32>
    %23 = vector.extract_strided_slice %21 {offsets = [16, 0], sizes = [16, 64], strides = [1, 1]} : vector<32x64xf32> to vector<16x64xf32>
    %c0_11 = arith.constant 0 : index
    %c0_12 = arith.constant 0 : index
    %24 = vector.load %arg7[%c0_11, %c0_12] : memref<64x64xf32, #tpu.memory_space<vmem>>, vector<64x64xf32>
    %cst_13 = arith.constant dense<0.000000e+00> : vector<16x64xf32>
    %25 = tpu.matmul %22, %24, %cst_13 {dimension_numbers = #tpu.dot_dimension_numbers<[1], [0], [0], [1], [0, 0, 1, 1], [], []>} : vector<16x64xf32>, vector<64x64xf32>, vector<16x64xf32> -> vector<16x64xf32>
    %c0_14 = arith.constant 0 : index
    %c0_15 = arith.constant 0 : index
    %26 = vector.load %arg8[%c0_14, %c0_15] : memref<1x64xf32, #tpu.memory_space<vmem>>, vector<1x64xf32>
    %27 = vector.broadcast %1 : vector<16x1xf32> to vector<16x64xf32>
    %28 = vector.broadcast %26 : vector<1x64xf32> to vector<16x64xf32>
    %29 = arith.mulf %27, %28 : vector<16x64xf32>
    %30 = arith.addf %25, %29 : vector<16x64xf32>
    %cst_16 = arith.constant 0.000000e+00 : f32
    %31 = vector.broadcast %cst_16 : f32 to vector<16x64xf32>
    %32 = arith.cmpf ogt, %30, %31 : vector<16x64xf32>
    %cst_17 = arith.constant 0.00999999977 : f32
    %33 = vector.broadcast %cst_17 : f32 to vector<16x64xf32>
    %34 = arith.mulf %33, %30 : vector<16x64xf32>
    %35 = arith.select %32, %30, %34 : vector<16x64xi1>, vector<16x64xf32>
    %c0_18 = arith.constant 0 : index
    %c0_19 = arith.constant 0 : index
    %36 = vector.load %arg5[%c0_18, %c0_19] : memref<1x64xf32, #tpu.memory_space<vmem>>, vector<1x64xf32>
    %37 = vector.broadcast %36 : vector<1x64xf32> to vector<16x64xf32>
    %38 = arith.mulf %35, %37 : vector<16x64xf32>
    %cst_20 = arith.constant dense<0.000000e+00> : vector<16xf32>
    %39 = vector.multi_reduction <add>, %38, %cst_20 [1] : vector<16x64xf32> to vector<16xf32>
    %40 = vector.shape_cast %39 : vector<16xf32> to vector<16x1xf32>
    %c0_21 = arith.constant 0 : index
    %c0_22 = arith.constant 0 : index
    %41 = vector.load %arg6[%c0_21, %c0_22] : memref<1x64xf32, #tpu.memory_space<vmem>>, vector<1x64xf32>
    %42 = vector.broadcast %41 : vector<1x64xf32> to vector<16x64xf32>
    %43 = arith.mulf %23, %42 : vector<16x64xf32>
    %cst_23 = arith.constant dense<0.000000e+00> : vector<16xf32>
    %44 = vector.multi_reduction <add>, %43, %cst_23 [1] : vector<16x64xf32> to vector<16xf32>
    %45 = vector.shape_cast %44 : vector<16xf32> to vector<16x1xf32>
    %46 = arith.addf %40, %45 : vector<16x1xf32>
    %cst_24 = arith.constant 0.000000e+00 : f32
    %47 = vector.broadcast %cst_24 : f32 to vector<16x1xf32>
    %48 = arith.cmpf ogt, %46, %47 : vector<16x1xf32>
    %cst_25 = arith.constant 0.00999999977 : f32
    %49 = vector.broadcast %cst_25 : f32 to vector<16x1xf32>
    %50 = arith.mulf %49, %46 : vector<16x1xf32>
    %51 = arith.select %48, %46, %50 : vector<16x1xi1>, vector<16x1xf32>
    %52 = vector.shape_cast %51 : vector<16x1xf32> to vector<1x16x1xf32>
    %cst_26 = arith.constant dense<0xFF800000> : vector<1xf32>
    %53 = vector.multi_reduction <maximumf>, %52, %cst_26 [1, 2] : vector<1x16x1xf32> to vector<1xf32>
    %54 = vector.shape_cast %53 : vector<1xf32> to vector<1x1x1xf32>
    %55 = vector.extract %54[0, 0, 0] : f32 from vector<1x1x1xf32>
    %56 = vector.broadcast %55 : f32 to vector<16x1xf32>
    %57 = arith.subf %51, %56 : vector<16x1xf32>
    %58 = math.exp %57 : vector<16x1xf32>
    %cst_27 = arith.constant dense<0.000000e+00> : vector<8x1xf32>
    %59 = tpu.matmul %8, %58, %cst_27 {dimension_numbers = #tpu.dot_dimension_numbers<[0], [0], [1], [1], [0, 1, 1, 1], [], []>} : vector<16x8xf32>, vector<16x1xf32>, vector<8x1xf32> -> vector<8x1xf32>
    %cst_28 = arith.constant dense<0.000000e+00> : vector<16x1xf32>
    %60 = tpu.matmul %8, %59, %cst_28 {dimension_numbers = #tpu.dot_dimension_numbers<[1], [0], [0], [1], [0, 0, 1, 1], [], []>} : vector<16x8xf32>, vector<8x1xf32>, vector<16x1xf32> -> vector<16x1xf32>
    %cst_29 = arith.constant 1.000000e-16 : f32
    %61 = vector.broadcast %cst_29 : f32 to vector<16x1xf32>
    %62 = arith.addf %60, %61 : vector<16x1xf32>
    %63 = arith.divf %58, %62 : vector<16x1xf32>
    %c0_30 = arith.constant 0 : index
    %c0_31 = arith.constant 0 : index
    %64 = vector.load %arg9[%c0_30, %c0_31] : memref<64x64xf32, #tpu.memory_space<vmem>>, vector<64x64xf32>
    %cst_32 = arith.constant dense<0.000000e+00> : vector<16x64xf32>
    %65 = tpu.matmul %35, %64, %cst_32 {dimension_numbers = #tpu.dot_dimension_numbers<[1], [0], [0], [1], [0, 0, 1, 1], [], []>} : vector<16x64xf32>, vector<64x64xf32>, vector<16x64xf32> -> vector<16x64xf32>
    %66 = vector.broadcast %63 : vector<16x1xf32> to vector<16x64xf32>
    %67 = arith.mulf %65, %66 : vector<16x64xf32>
    %cst_33 = arith.constant dense<0.000000e+00> : vector<8x64xf32>
    %68 = tpu.matmul %8, %67, %cst_33 {dimension_numbers = #tpu.dot_dimension_numbers<[0], [0], [1], [1], [0, 1, 1, 1], [], []>} : vector<16x8xf32>, vector<16x64xf32>, vector<8x64xf32> -> vector<8x64xf32>
    %c0_34 = arith.constant 0 : index
    %c0_35 = arith.constant 0 : index
    %69 = vector.load %arg10[%c0_34, %c0_35] : memref<1x64xf32, #tpu.memory_space<vmem>>, vector<1x64xf32>
    %70 = vector.broadcast %69 : vector<1x64xf32> to vector<8x64xf32>
    %71 = arith.addf %68, %70 : vector<8x64xf32>
    %cst_36 = arith.constant 0.000000e+00 : f32
    %72 = vector.broadcast %cst_36 : f32 to vector<8x64xf32>
    %73 = arith.cmpf ogt, %71, %72 : vector<8x64xf32>
    %cst_37 = arith.constant 0.000000e+00 : f32
    %74 = vector.broadcast %cst_37 : f32 to vector<8x64xf32>
    %75 = arith.minimumf %71, %74 : vector<8x64xf32>
    %76 = math.exp %75 : vector<8x64xf32>
    %cst_38 = arith.constant 1.000000e+00 : f32
    %77 = vector.broadcast %cst_38 : f32 to vector<8x64xf32>
    %78 = arith.subf %76, %77 : vector<8x64xf32>
    %79 = arith.select %73, %71, %78 : vector<8x64xi1>, vector<8x64xf32>
    %c0_39 = arith.constant 0 : index
    %c0_40 = arith.constant 0 : index
    %80 = vector.load %arg11[%c0_39, %c0_40] : memref<128x256xf32, #tpu.memory_space<vmem>>, vector<128x256xf32>
    %c0_41 = arith.constant 0 : index
    %c0_42 = arith.constant 0 : index
    %81 = vector.load %arg12[%c0_41, %c0_42] : memref<1x256xf32, #tpu.memory_space<vmem>>, vector<1x256xf32>
    %82 = tpu.concatenate %79, %20 in 1 : vector<8x64xf32>, vector<8x64xf32> -> vector<8x128xf32>
    %cst_43 = arith.constant dense<0.000000e+00> : vector<8x256xf32>
    %83 = tpu.matmul %82, %80, %cst_43 {dimension_numbers = #tpu.dot_dimension_numbers<[1], [0], [0], [1], [0, 0, 1, 1], [], []>} : vector<8x128xf32>, vector<128x256xf32>, vector<8x256xf32> -> vector<8x256xf32>
    %84 = vector.broadcast %81 : vector<1x256xf32> to vector<8x256xf32>
    %85 = arith.addf %83, %84 : vector<8x256xf32>
    %86 = vector.extract_strided_slice %85 {offsets = [0, 0], sizes = [8, 64], strides = [1, 1]} : vector<8x256xf32> to vector<8x64xf32>
    %cst_44 = arith.constant 0.000000e+00 : f32
    %87 = vector.broadcast %cst_44 : f32 to vector<8x64xf32>
    %88 = arith.subf %87, %86 : vector<8x64xf32>
    %89 = math.exp %88 : vector<8x64xf32>
    %cst_45 = arith.constant 1.000000e+00 : f32
    %90 = vector.broadcast %cst_45 : f32 to vector<8x64xf32>
    %91 = arith.addf %90, %89 : vector<8x64xf32>
    %cst_46 = arith.constant 1.000000e+00 : f32
    %92 = vector.broadcast %cst_46 : f32 to vector<8x64xf32>
    %93 = arith.divf %92, %91 : vector<8x64xf32>
    %94 = vector.extract_strided_slice %85 {offsets = [0, 64], sizes = [8, 64], strides = [1, 1]} : vector<8x256xf32> to vector<8x64xf32>
    %cst_47 = arith.constant 0.000000e+00 : f32
    %95 = vector.broadcast %cst_47 : f32 to vector<8x64xf32>
    %96 = arith.subf %95, %94 : vector<8x64xf32>
    %97 = math.exp %96 : vector<8x64xf32>
    %cst_48 = arith.constant 1.000000e+00 : f32
    %98 = vector.broadcast %cst_48 : f32 to vector<8x64xf32>
    %99 = arith.addf %98, %97 : vector<8x64xf32>
    %cst_49 = arith.constant 1.000000e+00 : f32
    %100 = vector.broadcast %cst_49 : f32 to vector<8x64xf32>
    %101 = arith.divf %100, %99 : vector<8x64xf32>
    %102 = vector.extract_strided_slice %85 {offsets = [0, 128], sizes = [8, 64], strides = [1, 1]} : vector<8x256xf32> to vector<8x64xf32>
    %103 = vector.extract_strided_slice %85 {offsets = [0, 192], sizes = [8, 64], strides = [1, 1]} : vector<8x256xf32> to vector<8x64xf32>
    %104 = arith.mulf %93, %103 : vector<8x64xf32>
    %105 = arith.addf %102, %104 : vector<8x64xf32>
    %106 = math.tanh %105 : vector<8x64xf32>
    %cst_50 = arith.constant 1.000000e+00 : f32
    %107 = vector.broadcast %cst_50 : f32 to vector<8x64xf32>
    %108 = arith.subf %107, %101 : vector<8x64xf32>
    %109 = arith.mulf %108, %106 : vector<8x64xf32>
    %110 = arith.mulf %101, %20 : vector<8x64xf32>
    %111 = arith.addf %109, %110 : vector<8x64xf32>
    %cst_51 = arith.constant 0.000000e+00 : f32
    %112 = vector.broadcast %cst_51 : f32 to vector<8x64xf32>
    %113 = arith.maximumf %111, %112 : vector<8x64xf32>
    %cst_52 = arith.constant dense<0.000000e+00> : vector<64xf32>
    %114 = vector.multi_reduction <add>, %113, %cst_52 [0] : vector<8x64xf32> to vector<64xf32>
    %115 = vector.shape_cast %114 : vector<64xf32> to vector<1x64xf32>
    %cst_53 = arith.constant 0.000000e+00 : f32
    %116 = vector.broadcast %cst_53 : f32 to vector<1x64xf32>
    %117 = arith.maximumf %115, %116 : vector<1x64xf32>
    %118 = tpu.concatenate %113, %117 in 0 : vector<8x64xf32>, vector<1x64xf32> -> vector<9x64xf32>
    %c0_54 = arith.constant 0 : index
    %c0_55 = arith.constant 0 : index
    %119 = vector.load %arg13[%c0_54, %c0_55] : memref<64x64xf32, #tpu.memory_space<vmem>>, vector<64x64xf32>
    %cst_56 = arith.constant dense<0.000000e+00> : vector<9x64xf32>
    %120 = tpu.matmul %118, %119, %cst_56 {dimension_numbers = #tpu.dot_dimension_numbers<[1], [0], [0], [1], [0, 0, 1, 1], [], []>} : vector<9x64xf32>, vector<64x64xf32>, vector<9x64xf32> -> vector<9x64xf32>
    %121 = vector.extract_strided_slice %120 {offsets = [0, 0], sizes = [8, 64], strides = [1, 1]} : vector<9x64xf32> to vector<8x64xf32>
    %122 = vector.extract_strided_slice %120 {offsets = [8, 0], sizes = [1, 64], strides = [1, 1]} : vector<9x64xf32> to vector<1x64xf32>
    %c0_57 = arith.constant 0 : index
    %c0_58 = arith.constant 0 : index
    %123 = vector.load %arg14[%c0_57, %c0_58] : memref<1x64xf32, #tpu.memory_space<vmem>>, vector<1x64xf32>
    %124 = vector.broadcast %123 : vector<1x64xf32> to vector<8x64xf32>
    %125 = arith.mulf %121, %124 : vector<8x64xf32>
    %cst_59 = arith.constant dense<0.000000e+00> : vector<8xf32>
    %126 = vector.multi_reduction <add>, %125, %cst_59 [1] : vector<8x64xf32> to vector<8xf32>
    %127 = vector.shape_cast %126 : vector<8xf32> to vector<8x1xf32>
    %c0_60 = arith.constant 0 : index
    %c0_61 = arith.constant 0 : index
    %128 = vector.load %arg15[%c0_60, %c0_61] : memref<1x64xf32, #tpu.memory_space<vmem>>, vector<1x64xf32>
    %129 = arith.mulf %122, %128 : vector<1x64xf32>
    %cst_62 = arith.constant dense<0.000000e+00> : vector<1xf32>
    %130 = vector.multi_reduction <add>, %129, %cst_62 [1] : vector<1x64xf32> to vector<1xf32>
    %131 = vector.shape_cast %130 : vector<1xf32> to vector<1x1xf32>
    %132 = vector.broadcast %131 : vector<1x1xf32> to vector<8x1xf32>
    %133 = arith.addf %127, %132 : vector<8x1xf32>
    %cst_63 = arith.constant 0.000000e+00 : f32
    %134 = vector.broadcast %cst_63 : f32 to vector<8x1xf32>
    %135 = arith.cmpf ogt, %133, %134 : vector<8x1xf32>
    %cst_64 = arith.constant 0.00999999977 : f32
    %136 = vector.broadcast %cst_64 : f32 to vector<8x1xf32>
    %137 = arith.mulf %136, %133 : vector<8x1xf32>
    %138 = arith.select %135, %133, %137 : vector<8x1xi1>, vector<8x1xf32>
    %139 = vector.shape_cast %138 : vector<8x1xf32> to vector<1x8x1xf32>
    %cst_65 = arith.constant dense<0xFF800000> : vector<1xf32>
    %140 = vector.multi_reduction <maximumf>, %139, %cst_65 [1, 2] : vector<1x8x1xf32> to vector<1xf32>
    %141 = vector.shape_cast %140 : vector<1xf32> to vector<1x1x1xf32>
    %142 = vector.extract %141[0, 0, 0] : f32 from vector<1x1x1xf32>
    %143 = vector.broadcast %142 : f32 to vector<8x1xf32>
    %144 = arith.subf %138, %143 : vector<8x1xf32>
    %145 = math.exp %144 : vector<8x1xf32>
    %146 = vector.shape_cast %145 : vector<8x1xf32> to vector<1x8x1xf32>
    %cst_66 = arith.constant dense<0.000000e+00> : vector<1xf32>
    %147 = vector.multi_reduction <add>, %146, %cst_66 [1, 2] : vector<1x8x1xf32> to vector<1xf32>
    %148 = vector.shape_cast %147 : vector<1xf32> to vector<1x1x1xf32>
    %149 = vector.extract %148[0, 0, 0] : f32 from vector<1x1x1xf32>
    %cst_67 = arith.constant 1.000000e-16 : f32
    %150 = arith.addf %149, %cst_67 : f32
    %151 = vector.broadcast %150 : f32 to vector<8x1xf32>
    %152 = arith.divf %145, %151 : vector<8x1xf32>
    %153 = vector.broadcast %152 : vector<8x1xf32> to vector<8x64xf32>
    %154 = arith.mulf %153, %121 : vector<8x64xf32>
    %cst_68 = arith.constant dense<0.000000e+00> : vector<64xf32>
    %155 = vector.multi_reduction <add>, %154, %cst_68 [0] : vector<8x64xf32> to vector<64xf32>
    %156 = vector.shape_cast %155 : vector<64xf32> to vector<1x64xf32>
    %c0_69 = arith.constant 0 : index
    %c0_70 = arith.constant 0 : index
    %157 = vector.load %arg16[%c0_69, %c0_70] : memref<1x64xf32, #tpu.memory_space<vmem>>, vector<1x64xf32>
    %158 = arith.addf %156, %157 : vector<1x64xf32>
    %cst_71 = arith.constant 0.000000e+00 : f32
    %159 = vector.broadcast %cst_71 : f32 to vector<1x64xf32>
    %160 = arith.cmpf ogt, %158, %159 : vector<1x64xf32>
    %cst_72 = arith.constant 0.000000e+00 : f32
    %161 = vector.broadcast %cst_72 : f32 to vector<1x64xf32>
    %162 = arith.minimumf %158, %161 : vector<1x64xf32>
    %163 = math.exp %162 : vector<1x64xf32>
    %cst_73 = arith.constant 1.000000e+00 : f32
    %164 = vector.broadcast %cst_73 : f32 to vector<1x64xf32>
    %165 = arith.subf %163, %164 : vector<1x64xf32>
    %166 = arith.select %160, %158, %165 : vector<1x64xi1>, vector<1x64xf32>
    %c0_74 = arith.constant 0 : index
    %c0_75 = arith.constant 0 : index
    %167 = vector.load %arg17[%c0_74, %c0_75] : memref<128x256xf32, #tpu.memory_space<vmem>>, vector<128x256xf32>
    %c0_76 = arith.constant 0 : index
    %c0_77 = arith.constant 0 : index
    %168 = vector.load %arg18[%c0_76, %c0_77] : memref<1x256xf32, #tpu.memory_space<vmem>>, vector<1x256xf32>
    %169 = tpu.concatenate %166, %117 in 1 : vector<1x64xf32>, vector<1x64xf32> -> vector<1x128xf32>
    %cst_78 = arith.constant dense<0.000000e+00> : vector<1x256xf32>
    %170 = tpu.matmul %169, %167, %cst_78 {dimension_numbers = #tpu.dot_dimension_numbers<[1], [0], [0], [1], [0, 0, 1, 1], [], []>} : vector<1x128xf32>, vector<128x256xf32>, vector<1x256xf32> -> vector<1x256xf32>
    %171 = arith.addf %170, %168 : vector<1x256xf32>
    %172 = vector.extract_strided_slice %171 {offsets = [0, 0], sizes = [1, 64], strides = [1, 1]} : vector<1x256xf32> to vector<1x64xf32>
    %cst_79 = arith.constant 0.000000e+00 : f32
    %173 = vector.broadcast %cst_79 : f32 to vector<1x64xf32>
    %174 = arith.subf %173, %172 : vector<1x64xf32>
    %175 = math.exp %174 : vector<1x64xf32>
    %cst_80 = arith.constant 1.000000e+00 : f32
    %176 = vector.broadcast %cst_80 : f32 to vector<1x64xf32>
    %177 = arith.addf %176, %175 : vector<1x64xf32>
    %cst_81 = arith.constant 1.000000e+00 : f32
    %178 = vector.broadcast %cst_81 : f32 to vector<1x64xf32>
    %179 = arith.divf %178, %177 : vector<1x64xf32>
    %180 = vector.extract_strided_slice %171 {offsets = [0, 64], sizes = [1, 64], strides = [1, 1]} : vector<1x256xf32> to vector<1x64xf32>
    %cst_82 = arith.constant 0.000000e+00 : f32
    %181 = vector.broadcast %cst_82 : f32 to vector<1x64xf32>
    %182 = arith.subf %181, %180 : vector<1x64xf32>
    %183 = math.exp %182 : vector<1x64xf32>
    %cst_83 = arith.constant 1.000000e+00 : f32
    %184 = vector.broadcast %cst_83 : f32 to vector<1x64xf32>
    %185 = arith.addf %184, %183 : vector<1x64xf32>
    %cst_84 = arith.constant 1.000000e+00 : f32
    %186 = vector.broadcast %cst_84 : f32 to vector<1x64xf32>
    %187 = arith.divf %186, %185 : vector<1x64xf32>
    %188 = vector.extract_strided_slice %171 {offsets = [0, 128], sizes = [1, 64], strides = [1, 1]} : vector<1x256xf32> to vector<1x64xf32>
    %189 = vector.extract_strided_slice %171 {offsets = [0, 192], sizes = [1, 64], strides = [1, 1]} : vector<1x256xf32> to vector<1x64xf32>
    %190 = arith.mulf %179, %189 : vector<1x64xf32>
    %191 = arith.addf %188, %190 : vector<1x64xf32>
    %192 = math.tanh %191 : vector<1x64xf32>
    %cst_85 = arith.constant 1.000000e+00 : f32
    %193 = vector.broadcast %cst_85 : f32 to vector<1x64xf32>
    %194 = arith.subf %193, %187 : vector<1x64xf32>
    %195 = arith.mulf %194, %192 : vector<1x64xf32>
    %196 = arith.mulf %187, %117 : vector<1x64xf32>
    %197 = arith.addf %195, %196 : vector<1x64xf32>
    %cst_86 = arith.constant 0.000000e+00 : f32
    %198 = vector.broadcast %cst_86 : f32 to vector<1x64xf32>
    %199 = arith.maximumf %197, %198 : vector<1x64xf32>
    %c0_87 = arith.constant 0 : index
    %c0_88 = arith.constant 0 : index
    %200 = vector.load %arg19[%c0_87, %c0_88] : memref<64x64xf32, #tpu.memory_space<vmem>>, vector<64x64xf32>
    %cst_89 = arith.constant dense<0.000000e+00> : vector<1x64xf32>
    %201 = tpu.matmul %199, %200, %cst_89 {dimension_numbers = #tpu.dot_dimension_numbers<[1], [0], [0], [1], [0, 0, 1, 1], [], []>} : vector<1x64xf32>, vector<64x64xf32>, vector<1x64xf32> -> vector<1x64xf32>
    %c0_90 = arith.constant 0 : index
    %c0_91 = arith.constant 0 : index
    %202 = vector.load %arg20[%c0_90, %c0_91] : memref<1x64xf32, #tpu.memory_space<vmem>>, vector<1x64xf32>
    %203 = arith.addf %201, %202 : vector<1x64xf32>
    %c0_92 = arith.constant 0 : index
    %c0_93 = arith.constant 0 : index
    %204 = vector.load %arg21[%c0_92, %c0_93] : memref<1x64xf32, #tpu.memory_space<vmem>>, vector<1x64xf32>
    tpu.vector_store %arg21[%c0_92, %c0_93], %203 {strides = array<i32>} : memref<1x64xf32, #tpu.memory_space<vmem>>, vector<1x64xf32>,
    return
  }
}

</mosaic_0001>

<llo_original>
// kernel: tpu_custom_call.1
$region0: #{tpu_custom_call.1}
  #allocation0 [shape = 'u32[]', space=smem, size = 0x4, offset = 0x4, fixed_abs, tag = 'smem constant byte address 0x4 - core index']
  #allocation1 [shape = 'u32[144,128]{1,0:T(1,128)}', space=vmem, size = 0x12000, scoped, tag = 'internal scratch']
  %s0 = inlined_call_operand.vmem [shape: f32[8,1], index: 0, kind: input, shape index: {}]
  %s1 = inlined_call_operand.vmem [shape: f32[16,1], index: 1, kind: input, shape index: {}]
  %s2 = inlined_call_operand.vmem [shape: s32[32,1], index: 2, kind: input, shape index: {}]
  %s3 = inlined_call_operand.vmem [shape: f32[1,64], index: 3, kind: input, shape index: {}]
  %s4 = inlined_call_operand.vmem [shape: f32[1,64], index: 4, kind: input, shape index: {}]
  %s5 = inlined_call_operand.vmem [shape: f32[1,64], index: 5, kind: input, shape index: {}]
  %s6 = inlined_call_operand.hbm [shape: f32[1,64], index: 6, kind: input, shape index: {}]
  %s7 = inlined_call_operand.vmem [shape: f32[64,64], index: 7, kind: input, shape index: {}]
  %s8 = inlined_call_operand.vmem [shape: f32[1,64], index: 8, kind: input, shape index: {}]
  %s9 = inlined_call_operand.hbm [shape: f32[64,64], index: 9, kind: input, shape index: {}]
  %s10 = inlined_call_operand.vmem [shape: f32[1,64], index: 10, kind: input, shape index: {}]
  %s11 = inlined_call_operand.hbm [shape: f32[128,256], index: 11, kind: input, shape index: {}]
  %s12 = inlined_call_operand.vmem [shape: f32[1,256], index: 12, kind: input, shape index: {}]
  %s13 = inlined_call_operand.hbm [shape: f32[64,64], index: 13, kind: input, shape index: {}]
  %s14 = inlined_call_operand.vmem [shape: f32[1,64], index: 14, kind: input, shape index: {}]
  %s15 = inlined_call_operand.vmem [shape: f32[1,64], index: 15, kind: input, shape index: {}]
  %s16 = inlined_call_operand.vmem [shape: f32[1,64], index: 16, kind: input, shape index: {}]
  %s17 = inlined_call_operand.hbm [shape: f32[128,256], index: 17, kind: input, shape index: {}]
  %s18 = inlined_call_operand.vmem [shape: f32[1,256], index: 18, kind: input, shape index: {}]
  %s19 = inlined_call_operand.hbm [shape: f32[64,64], index: 19, kind: input, shape index: {}]
  %s20 = inlined_call_operand.vmem [shape: f32[1,64], index: 20, kind: input, shape index: {}]
  %s21 = inlined_call_operand.hbm [shape: f32[1,64], index: 21, kind: output, shape index: {}]
  %s22 = sld [smem:[#allocation0]]
  $region118: #{tpu_custom_call.1} parent=0
    _
  %s24 = ssub.s32 1, %s22
  %s25 = scalar_select 0, %s24, %s22
  $region1: #{tpu_custom_call.1} parent=0
    #allocation2 [shape = 'u8[512]{0}', space=vmem, size = 0x400, scoped, tag = 'input window, operand 6, single buffered']
    #allocation3 [shape = 's32[1]{0}', space=sflag, size = 0x4, scoped, tag = 'scoped memory for tpu_custom_call.1']
    #allocation4 [shape = 's32[1]{0}', space=sflag, size = 0x4, scoped, tag = 'scoped memory for tpu_custom_call.1']
    #allocation5 [shape = 'u8[32768]{0}', space=vmem, size = 0x8000, scoped, tag = 'input window, operand 9, single buffered']
    #allocation6 [shape = 's32[1]{0}', space=sflag, size = 0x4, scoped, tag = 'scoped memory for tpu_custom_call.1']
    #allocation7 [shape = 'u8[131072]{0}', space=vmem, size = 0x20000, scoped, tag = 'input window, operand 11, single buffered']
    #allocation8 [shape = 'u8[32768]{0}', space=vmem, size = 0x8000, scoped, tag = 'input window, operand 13, single buffered']
    #allocation9 [shape = 's32[1]{0}', space=sflag, size = 0x4, scoped, tag = 'scoped memory for tpu_custom_call.1']
    #allocation10 [shape = 'u8[131072]{0}', space=vmem, size = 0x20000, scoped, tag = 'input window, operand 17, single buffered']
    #allocation11 [shape = 'u8[32768]{0}', space=vmem, size = 0x8000, scoped, tag = 'input window, operand 19, single buffered']
    #allocation12 [shape = 's32[1]{0}', space=sflag, size = 0x4, scoped, tag = 'scoped memory for tpu_custom_call.1']
    #allocation13 [shape = 'u8[512]{0}', space=vmem, size = 0x400, scoped, tag = 'output window, operand 0, single buffered']
    %26 = vsyncpa [#allocation3], 0
    %27 = vsyncpa [#allocation6], 0
    %28 = vsyncpa [#allocation9], 0
    %29 = vsyncpa [#allocation12], 0
    %30 = vsyncpa [#allocation4], 0
    // Predicated region
    $region2: #{tpu_custom_call.1} parent=1 // pred_check
      _
    $region3: #{tpu_custom_call.1} parent=1 // pred_check_branch
      %32 = sbr.rel (0) target = $region5
    $region4: #{tpu_custom_call.1} parent=1 // pred_region
      _
    $region5: #{tpu_custom_call.1} parent=1 // pred_fallthru
      _
    // Predicated region
    $region6: #{tpu_custom_call.1} parent=1 // pred_check
      _
    $region7: #{tpu_custom_call.1} parent=1 // pred_check_branch
      %34 = sbr.rel (0) target = $region9
    $region8: #{tpu_custom_call.1} parent=1 // pred_region
      _
    $region9: #{tpu_custom_call.1} parent=1 // pred_fallthru
      _
    // Predicated region
    $region10: #{tpu_custom_call.1} parent=1 // pred_check
      _
    $region11: #{tpu_custom_call.1} parent=1 // pred_check_branch
      %36 = sbr.rel (0) target = $region13
    $region12: #{tpu_custom_call.1} parent=1 // pred_region
      _
    $region13: #{tpu_custom_call.1} parent=1 // pred_fallthru
      _
    // Predicated region
    $region14: #{tpu_custom_call.1} parent=1 // pred_check
      _
    $region15: #{tpu_custom_call.1} parent=1 // pred_check_branch
      %38 = sbr.rel (0) target = $region17
    $region16: #{tpu_custom_call.1} parent=1 // pred_region
      _
    $region17: #{tpu_custom_call.1} parent=1 // pred_fallthru
      _
    // Predicated region
    $region18: #{tpu_custom_call.1} parent=1 // pred_check
      _
    $region19: #{tpu_custom_call.1} parent=1 // pred_check_branch
      %40 = sbr.rel (0) target = $region21
    $region20: #{tpu_custom_call.1} parent=1 // pred_region
      _
    $region21: #{tpu_custom_call.1} parent=1 // pred_fallthru
      _
    // Predicated region
    $region22: #{tpu_custom_call.1} parent=1 // pred_check
      _
    $region23: #{tpu_custom_call.1} parent=1 // pred_check_branch
      %42 = sbr.rel (0) target = $region25
    $region24: #{tpu_custom_call.1} parent=1 // pred_region
      _
    $region25: #{tpu_custom_call.1} parent=1 // pred_fallthru
      _
    // Predicated region
    $region26: #{tpu_custom_call.1} parent=1 // pred_check
      _
    $region27: #{tpu_custom_call.1} parent=1 // pred_check_branch
      %44 = sbr.rel (0) target = $region29
    $region28: #{tpu_custom_call.1} parent=1 // pred_region
      %s46 = ssub.s32 16, 16
      %47 = vsyncadd [#allocation3], %s46
      %s49 = sshll.u32 [#allocation2], 4
      %s50 = int_to_ptr.vmem [resolvable:$true] %s49
      %52 = dma.hbm_to_vmem [thread:$0]  %s6, 16, %s50, [#allocation3]
    $region29: #{tpu_custom_call.1} parent=1 // pred_fallthru
      _
    // Predicated region
    $region30: #{tpu_custom_call.1} parent=1 // pred_check
      _
    $region31: #{tpu_custom_call.1} parent=1 // pred_check_branch
      %54 = sbr.rel (0) target = $region33
    $region32: #{tpu_custom_call.1} parent=1 // pred_region
      _
    $region33: #{tpu_custom_call.1} parent=1 // pred_fallthru
      _
    // Predicated region
    $region34: #{tpu_custom_call.1} parent=1 // pred_check
      _
    $region35: #{tpu_custom_call.1} parent=1 // pred_check_branch
      %56 = sbr.rel (0) target = $region37
    $region36: #{tpu_custom_call.1} parent=1 // pred_region
      _
    $region37: #{tpu_custom_call.1} parent=1 // pred_fallthru
      _
    // Predicated region
    $region38: #{tpu_custom_call.1} parent=1 // pred_check
      _
    $region39: #{tpu_custom_call.1} parent=1 // pred_check_branch
      %58 = sbr.rel (0) target = $region41
    $region40: #{tpu_custom_call.1} parent=1 // pred_region
      %s60 = ssub.s32 1024, 1024
      %61 = vsyncadd [#allocation6], %s60
      %s62 = sshll.u32 [#allocation5], 4
      %s63 = int_to_ptr.vmem [resolvable:$true] %s62
      %68 = dma.hbm_to_vmem [thread:$0]  %s9, 1024, %s63, [#allocation6], 128, 128, 8
    $region41: #{tpu_custom_call.1} parent=1 // pred_fallthru
      _
    // Predicated region
    $region42: #{tpu_custom_call.1} parent=1 // pred_check
      _
    $region43: #{tpu_custom_call.1} parent=1 // pred_check_branch
      %70 = sbr.rel (0) target = $region45
    $region44: #{tpu_custom_call.1} parent=1 // pred_region
      _
    $region45: #{tpu_custom_call.1} parent=1 // pred_fallthru
      _
    // Predicated region
    $region46: #{tpu_custom_call.1} parent=1 // pred_check
      _
    $region47: #{tpu_custom_call.1} parent=1 // pred_check_branch
      %72 = sbr.rel (0) target = $region49
    $region48: #{tpu_custom_call.1} parent=1 // pred_region
      %s74 = ssub.s32 4096, 4096
      %75 = vsyncadd [#allocation6], %s74
      %s76 = sshll.u32 [#allocation7], 4
      %s77 = int_to_ptr.vmem [resolvable:$true] %s76
      %82 = dma.hbm_to_vmem [thread:$0]  %s11, 4096, %s77, [#allocation6], 256, 256, 16
    $region49: #{tpu_custom_call.1} parent=1 // pred_fallthru
      _
    // Predicated region
    $region50: #{tpu_custom_call.1} parent=1 // pred_check
      _
    $region51: #{tpu_custom_call.1} parent=1 // pred_check_branch
      %84 = sbr.rel (0) target = $region53
    $region52: #{tpu_custom_call.1} parent=1 // pred_region
      _
    $region53: #{tpu_custom_call.1} parent=1 // pred_fallthru
      _
    // Predicated region
    $region54: #{tpu_custom_call.1} parent=1 // pred_check
      _
    $region55: #{tpu_custom_call.1} parent=1 // pred_check_branch
      %86 = sbr.rel (0) target = $region57
    $region56: #{tpu_custom_call.1} parent=1 // pred_region
      %s88 = ssub.s32 1024, 1024
      %89 = vsyncadd [#allocation9], %s88
      %s90 = sshll.u32 [#allocation8], 4
      %s91 = int_to_ptr.vmem [resolvable:$true] %s90
      %96 = dma.hbm_to_vmem [thread:$0]  %s13, 1024, %s91, [#allocation9], 128, 128, 8
    $region57: #{tpu_custom_call.1} parent=1 // pred_fallthru
      _
    // Predicated region
    $region58: #{tpu_custom_call.1} parent=1 // pred_check
      _
    $region59: #{tpu_custom_call.1} parent=1 // pred_check_branch
      %98 = sbr.rel (0) target = $region61
    $region60: #{tpu_custom_call.1} parent=1 // pred_region
      _
    $region61: #{tpu_custom_call.1} parent=1 // pred_fallthru
      _
    // Predicated region
    $region62: #{tpu_custom_call.1} parent=1 // pred_check
      _
    $region63: #{tpu_custom_call.1} parent=1 // pred_check_branch
      %100 = sbr.rel (0) target = $region65
    $region64: #{tpu_custom_call.1} parent=1 // pred_region
      _
    $region65: #{tpu_custom_call.1} parent=1 // pred_fallthru
      _
    // Predicated region
    $region66: #{tpu_custom_call.1} parent=1 // pred_check
      _
    $region67: #{tpu_custom_call.1} parent=1 // pred_check_branch
      %102 = sbr.rel (0) target = $region69
    $region68: #{tpu_custom_call.1} parent=1 // pred_region
      _
    $region69: #{tpu_custom_call.1} parent=1 // pred_fallthru
      _
    // Predicated region
    $region70: #{tpu_custom_call.1} parent=1 // pred_check
      _
    $region71: #{tpu_custom_call.1} parent=1 // pred_check_branch
      %104 = sbr.rel (0) target = $region73
    $region72: #{tpu_custom_call.1} parent=1 // pred_region
      %s106 = ssub.s32 4096, 4096
      %107 = vsyncadd [#allocation9], %s106
      %s108 = sshll.u32 [#allocation10], 4
      %s109 = int_to_ptr.vmem [resolvable:$true] %s108
      %114 = dma.hbm_to_vmem [thread:$0]  %s17, 4096, %s109, [#allocation9], 256, 256, 16
    $region73: #{tpu_custom_call.1} parent=1 // pred_fallthru
      _
    // Predicated region
    $region74: #{tpu_custom_call.1} parent=1 // pred_check
      _
    $region75: #{tpu_custom_call.1} parent=1 // pred_check_branch
      %116 = sbr.rel (0) target = $region77
    $region76: #{tpu_custom_call.1} parent=1 // pred_region
      _
    $region77: #{tpu_custom_call.1} parent=1 // pred_fallthru
      _
    // Predicated region
    $region78: #{tpu_custom_call.1} parent=1 // pred_check
      _
    $region79: #{tpu_custom_call.1} parent=1 // pred_check_branch
      %118 = sbr.rel (0) target = $region81
    $region80: #{tpu_custom_call.1} parent=1 // pred_region
      %s120 = ssub.s32 1024, 1024
      %121 = vsyncadd [#allocation12], %s120
      %s122 = sshll.u32 [#allocation11], 4
      %s123 = int_to_ptr.vmem [resolvable:$true] %s122
      %128 = dma.hbm_to_vmem [thread:$0]  %s19, 1024, %s123, [#allocation12], 128, 128, 8
    $region81: #{tpu_custom_call.1} parent=1 // pred_fallthru
      _
    // Predicated region
    $region82: #{tpu_custom_call.1} parent=1 // pred_check
      _
    $region83: #{tpu_custom_call.1} parent=1 // pred_check_branch
      %130 = sbr.rel (0) target = $region85
    $region84: #{tpu_custom_call.1} parent=1 // pred_region
      _
    $region85: #{tpu_custom_call.1} parent=1 // pred_fallthru
      _
    // Predicated region
    $region86: #{tpu_custom_call.1} parent=1 // pred_check
      _
    $region87: #{tpu_custom_call.1} parent=1 // pred_check_branch
      %132 = sbr.rel (0) target = $region89
    $region88: #{tpu_custom_call.1} parent=1 // pred_region
      %133 = dma.done [#allocation3], 16
    $region89: #{tpu_custom_call.1} parent=1 // pred_fallthru
      _
    // Predicated region
    $region90: #{tpu_custom_call.1} parent=1 // pred_check
      _
    $region91: #{tpu_custom_call.1} parent=1 // pred_check_branch
      %135 = sbr.rel (0) target = $region93
    $region92: #{tpu_custom_call.1} parent=1 // pred_region
      %136 = dma.done [#allocation6], 1024
    $region93: #{tpu_custom_call.1} parent=1 // pred_fallthru
      _
    // Predicated region
    $region94: #{tpu_custom_call.1} parent=1 // pred_check
      _
    $region95: #{tpu_custom_call.1} parent=1 // pred_check_branch
      %138 = sbr.rel (0) target = $region97
    $region96: #{tpu_custom_call.1} parent=1 // pred_region
      %139 = dma.done [#allocation6], 4096
    $region97: #{tpu_custom_call.1} parent=1 // pred_fallthru
      _
    // Predicated region
    $region98: #{tpu_custom_call.1} parent=1 // pred_check
      _
    $region99: #{tpu_custom_call.1} parent=1 // pred_check_branch
      %141 = sbr.rel (0) target = $region101
    $region100: #{tpu_custom_call.1} parent=1 // pred_region
      %142 = dma.done [#allocation9], 1024
    $region101: #{tpu_custom_call.1} parent=1 // pred_fallthru
      _
    // Predicated region
    $region102: #{tpu_custom_call.1} parent=1 // pred_check
      _
    $region103: #{tpu_custom_call.1} parent=1 // pred_check_branch
      %144 = sbr.rel (0) target = $region105
    $region104: #{tpu_custom_call.1} parent=1 // pred_region
      %145 = dma.done [#allocation9], 4096
    $region105: #{tpu_custom_call.1} parent=1 // pred_fallthru
      _
    // Predicated region
    $region106: #{tpu_custom_call.1} parent=1 // pred_check
      _
    $region107: #{tpu_custom_call.1} parent=1 // pred_check_branch
      %147 = sbr.rel (0) target = $region109
    $region108: #{tpu_custom_call.1} parent=1 // pred_region
      %148 = dma.done [#allocation12], 1024
    $region109: #{tpu_custom_call.1} parent=1 // pred_fallthru
      _
    %v149 = vld [vmem:[%s0] sm:$0xff]
    %v150 = vld [vmem:[%s1] sm:$0xff]
    %v151 = vld [vmem:[%s1 + $0x8] sm:$0xff]
    %v152 = vld [vmem:[%s2] sm:$0xff]
    %v153 = vld [vmem:[%s2 + $0x8] sm:$0xff]
    %v154 = vld [vmem:[%s2 + $0x10] sm:$0xff]
    %v155 = vld [vmem:[%s2 + $0x18] sm:$0xff]
    %v156 = vlaneseq
    %v157 = vand.u32 %v156, 127
    %158 = vset.pattern.permute.xlu0 0
    %159 = vperm.xlu0 %158, %v152
    %v160 = vpop.permute.xlu0 %159
    %161 = vset.pattern.permute.xlu0 0
    %162 = vperm.xlu0 %161, %v153
    %v163 = vpop.permute.xlu0 %162
    %164 = vset.pattern.permute.xlu0 0
    %165 = vperm.xlu0 %164, %v154
    %v166 = vpop.permute.xlu0 %165
    %167 = vset.pattern.permute.xlu0 0
    %168 = vperm.xlu0 %167, %v155
    %v169 = vpop.permute.xlu0 %168
    %vm170 = vcmp.eq.s32.totalorder %v157, %v160
    %vm171 = vcmp.eq.s32.totalorder %v157, %v163
    %vm172 = vcmp.eq.s32.totalorder %v157, %v166
    %vm173 = vcmp.eq.s32.totalorder %v157, %v169
    %v174 = vsel %vm170, 1, 0
    %v175 = vsel %vm171, 1, 0
    %v176 = vsel %vm172, 1, 0
    %v177 = vsel %vm173, 1, 0
    %v178 = vcvt.s32.f32 %v174
    %v179 = vcvt.s32.f32 %v175
    %v180 = vcvt.s32.f32 %v176
    %v181 = vcvt.s32.f32 %v177
    %v182 = vld [vmem:[%s3] sm:$0x1]
    %184 = vset.pattern.permute.xlu0 0
    %185 = vperm.xlu0 %184, %v149
    %v186 = vpop.permute.xlu0 %185
    %v189 = vlaneseq
    %v190 = vshrl.u32 %v189, 7
    %v191 = vsub.s32 0, %v190
    %v192 = vrot.slane %v182, %v191
    %v194 = vmul.f32 %v186, %v192
    %v195 = vld [vmem:[%s4] sm:$0x1]
    %v197 = vlaneseq
    %v198 = vshrl.u32 %v197, 7
    %v199 = vsub.s32 0, %v198
    %v200 = vrot.slane %v195, %v199
    %v202 = vadd.f32 %v194, %v200
    %vm203 = vcmp.gt.f32.partialorder %v202, 0.0
    %v204 = vmul.f32 %v202, 0.01
    %v205 = vsel %vm203, %v202, %v204
    %vm206 = vcmask 64512
    %v208 = vsel %vm206, %v178, 0
    %v211 = vsel %vm206, %v179, 0
    %v214 = vsel %vm206, %v180, 0
    %v217 = vsel %vm206, %v181, 0
    %219 = vmatprep.subr.mxu0 0.0
    %220 = vmatpush1.msra.mxu0 0.0
    %221 = vmatprep.subr.mxu0 0.0
    %222 = vmatpush1.msra.mxu0 0.0
    %223 = vmatprep.subr.mxu0 0.0
    %224 = vmatpush1.msra.mxu0 0.0
    %225 = vmatprep.subr.mxu0 0.0
    %226 = vmatpush1.msra.mxu0 0.0
    %227 = vmatprep.subr.mxu0 0.0
    %228 = vmatpush1.msra.mxu0 0.0
    %229 = vmatprep.subr.mxu0 0.0
    %230 = vmatpush1.msra.mxu0 0.0
    %231 = vmatprep.subr.mxu0 0.0
    %232 = vmatpush1.msra.mxu0 0.0
    %233 = vmatprep.subr.mxu0 0.0
    %234 = vmatpush1.msra.mxu0 0.0
    %235 = vmatprep.subr.mxu0 0.0
    %236 = vmatpush1.msra.mxu0 0.0
    %237 = vmatprep.subr.mxu0 0.0
    %238 = vmatpush1.msra.mxu0 0.0
    %239 = vmatprep.subr.mxu0 0.0
    %240 = vmatpush1.msra.mxu0 0.0
    %241 = vmatprep.subr.mxu0 0.0
    %242 = vmatpush1.msra.mxu0 0.0
    %243 = vmatprep.subr.mxu0 0.0
    %244 = vmatpush1.msra.mxu0 0.0
    %245 = vmatprep.subr.mxu0 0.0
    %246 = vmatpush1.msra.mxu0 0.0
    %247 = vmatprep.subr.mxu0 0.0
    %248 = vmatpush1.msra.mxu0 0.0
    %249 = vmatprep.subr.mxu0 0.0
    %250 = vmatpush1.msra.mxu0 %v205
    %251 = vmatprep.subr.mxu0 0.0
    %252 = vmatpush2.msra.mxu0 0.0
    %253 = vmatprep.subr.mxu0 0.0
    %254 = vmatpush2.msra.mxu0 0.0
    %255 = vmatprep.subr.mxu0 0.0
    %256 = vmatpush2.msra.mxu0 0.0
    %257 = vmatprep.subr.mxu0 0.0
    %258 = vmatpush2.msra.mxu0 0.0
    %259 = vmatprep.subr.mxu0 0.0
    %260 = vmatpush2.msra.mxu0 0.0
    %261 = vmatprep.subr.mxu0 0.0
    %262 = vmatpush2.msra.mxu0 0.0
    %263 = vmatprep.subr.mxu0 0.0
    %264 = vmatpush2.msra.mxu0 0.0
    %265 = vmatprep.subr.mxu0 0.0
    %266 = vmatpush2.msra.mxu0 0.0
    %267 = vmatprep.subr.mxu0 0.0
    %268 = vmatpush2.msra.mxu0 0.0
    %269 = vmatprep.subr.mxu0 0.0
    %270 = vmatpush2.msra.mxu0 0.0
    %271 = vmatprep.subr.mxu0 0.0
    %272 = vmatpush2.msra.mxu0 0.0
    %273 = vmatprep.subr.mxu0 0.0
    %274 = vmatpush2.msra.mxu0 0.0
    %275 = vmatprep.subr.mxu0 0.0
    %276 = vmatpush2.msra.mxu0 0.0
    %277 = vmatprep.subr.mxu0 0.0
    %278 = vmatpush2.msra.mxu0 0.0
    %279 = vmatprep.subr.mxu0 0.0
    %280 = vmatpush2.msra.mxu0 0.0
    %281 = vmatprep.subr.mxu0 0.0
    %282 = vmatpush2.msra.mxu0 0.0
    %283 = vmatprep.mubr.f32.mxu0 0.0
    %284 = vmatmul.mubr.f32.gmra.mxu0 %v208
    %v285 = vpop.f32.mrf.mxu0
    %v286 = vadd.f32 0.0, %v285
    %v287 = vpop.f32.mrf.mxu0
    %288 = vmatprep.mubr.f32.mxu0 0.0
    %289 = vmatmul.mubr.f32.gmra.mxu0 %v211
    %v290 = vpop.f32.mrf.mxu0
    %v291 = vadd.f32 0.0, %v290
    %v292 = vpop.f32.mrf.mxu0
    %293 = vmatprep.mubr.f32.mxu0 0.0
    %294 = vmatmul.mubr.f32.gmra.mxu0 %v214
    %v295 = vpop.f32.mrf.mxu0
    %v296 = vadd.f32 0.0, %v295
    %v297 = vpop.f32.mrf.mxu0
    %298 = vmatprep.mubr.f32.mxu0 0.0
    %299 = vmatmul.mubr.f32.gmra.mxu0 %v217
    %v300 = vpop.f32.mrf.mxu0
    %v301 = vadd.f32 0.0, %v300
    %v302 = vpop.f32.mrf.mxu0
    %303 = vdwg.mxu0
    %v304 = vld [vmem:[%s7] sm:$0xff]
    %v305 = vld [vmem:[%s7 + $0x8] sm:$0xff]
    %v306 = vld [vmem:[%s7 + $0x10] sm:$0xff]
    %v307 = vld [vmem:[%s7 + $0x18] sm:$0xff]
    %v308 = vld [vmem:[%s7 + $0x20] sm:$0xff]
    %v309 = vld [vmem:[%s7 + $0x28] sm:$0xff]
    %v310 = vld [vmem:[%s7 + $0x30] sm:$0xff]
    %v311 = vld [vmem:[%s7 + $0x38] sm:$0xff]
    %v312 = vld [vmem:[%s8] sm:$0x1]
    %314 = vset.pattern.permute.xlu0 0
    %315 = vperm.xlu0 %314, %v150
    %v316 = vpop.permute.xlu0 %315
    %319 = vset.pattern.permute.xlu0 0
    %320 = vperm.xlu0 %319, %v151
    %v321 = vpop.permute.xlu0 %320
    %v324 = vlaneseq
    %v325 = vshrl.u32 %v324, 7
    %v326 = vsub.s32 0, %v325
    %v327 = vrot.slane %v312, %v326
    %v329 = vmul.f32 %v316, %v327
    %v330 = vmul.f32 %v321, %v327
    %vm331 = vcmask 523264
    %v333 = vsel %vm331, %v286, 0
    %v336 = vsel %vm331, %v291, 0
    %338 = vmatprep.subr.mxu0 0.0
    %339 = vmatpush1.msra.mxu0 0.0
    %340 = vmatprep.subr.mxu0 0.0
    %341 = vmatpush1.msra.mxu0 0.0
    %342 = vmatprep.subr.mxu0 0.0
    %343 = vmatpush1.msra.mxu0 0.0
    %344 = vmatprep.subr.mxu0 0.0
    %345 = vmatpush1.msra.mxu0 0.0
    %346 = vmatprep.subr.mxu0 0.0
    %347 = vmatpush1.msra.mxu0 0.0
    %348 = vmatprep.subr.mxu0 0.0
    %349 = vmatpush1.msra.mxu0 0.0
    %350 = vmatprep.subr.mxu0 0.0
    %351 = vmatpush1.msra.mxu0 0.0
    %352 = vmatprep.subr.mxu0 0.0
    %353 = vmatpush1.msra.mxu0 0.0
    %354 = vmatprep.subr.mxu0 0.0
    %355 = vmatpush1.msra.mxu0 %v311
    %356 = vmatprep.subr.mxu0 0.0
    %357 = vmatpush1.msra.mxu0 %v310
    %358 = vmatprep.subr.mxu0 0.0
    %359 = vmatpush1.msra.mxu0 %v309
    %360 = vmatprep.subr.mxu0 0.0
    %361 = vmatpush1.msra.mxu0 %v308
    %362 = vmatprep.subr.mxu0 0.0
    %363 = vmatpush1.msra.mxu0 %v307
    %364 = vmatprep.subr.mxu0 0.0
    %365 = vmatpush1.msra.mxu0 %v306
    %366 = vmatprep.subr.mxu0 0.0
    %367 = vmatpush1.msra.mxu0 %v305
    %368 = vmatprep.subr.mxu0 0.0
    %369 = vmatpush1.msra.mxu0 %v304
    %370 = vmatprep.subr.mxu0 0.0
    %371 = vmatpush2.msra.mxu0 0.0
    %372 = vmatprep.subr.mxu0 0.0
    %373 = vmatpush2.msra.mxu0 0.0
    %374 = vmatprep.subr.mxu0 0.0
    %375 = vmatpush2.msra.mxu0 0.0
    %376 = vmatprep.subr.mxu0 0.0
    %377 = vmatpush2.msra.mxu0 0.0
    %378 = vmatprep.subr.mxu0 0.0
    %379 = vmatpush2.msra.mxu0 0.0
    %380 = vmatprep.subr.mxu0 0.0
    %381 = vmatpush2.msra.mxu0 0.0
    %382 = vmatprep.subr.mxu0 0.0
    %383 = vmatpush2.msra.mxu0 0.0
    %384 = vmatprep.subr.mxu0 0.0
    %385 = vmatpush2.msra.mxu0 0.0
    %386 = vmatprep.subr.mxu0 0.0
    %387 = vmatpush2.msra.mxu0 0.0
    %388 = vmatprep.subr.mxu0 0.0
    %389 = vmatpush2.msra.mxu0 0.0
    %390 = vmatprep.subr.mxu0 0.0
    %391 = vmatpush2.msra.mxu0 0.0
    %392 = vmatprep.subr.mxu0 0.0
    %393 = vmatpush2.msra.mxu0 0.0
    %394 = vmatprep.subr.mxu0 0.0
    %395 = vmatpush2.msra.mxu0 0.0
    %396 = vmatprep.subr.mxu0 0.0
    %397 = vmatpush2.msra.mxu0 0.0
    %398 = vmatprep.subr.mxu0 0.0
    %399 = vmatpush2.msra.mxu0 0.0
    %400 = vmatprep.subr.mxu0 0.0
    %401 = vmatpush2.msra.mxu0 0.0
    %402 = vmatprep.mubr.f32.mxu0 0.0
    %403 = vmatmul.mubr.f32.gmra.mxu0 %v333
    %v404 = vpop.f32.mrf.mxu0
    %v405 = vadd.f32 %v329, %v404
    %v406 = vpop.f32.mrf.mxu0
    %407 = vmatprep.mubr.f32.mxu0 0.0
    %408 = vmatmul.mubr.f32.gmra.mxu0 %v336
    %v409 = vpop.f32.mrf.mxu0
    %v410 = vadd.f32 %v330, %v409
    %v411 = vpop.f32.mrf.mxu0
    %412 = vdwg.mxu0
    %vm413 = vcmp.gt.f32.partialorder %v405, 0.0
    %vm414 = vcmp.gt.f32.partialorder %v410, 0.0
    %v415 = vmul.f32 %v405, 0.01
    %v416 = vmul.f32 %v410, 0.01
    %v417 = vsel %vm413, %v405, %v415
    %v418 = vsel %vm414, %v410, %v416
    %v419 = vld [vmem:[%s5] sm:$0x1]
    %v421 = vlaneseq
    %v422 = vshrl.u32 %v421, 7
    %v423 = vsub.s32 0, %v422
    %v424 = vrot.slane %v419, %v423
    %v426 = vmul.f32 %v417, %v424
    %v427 = vmul.f32 %v418, %v424
    %v428 = vsel %vm331, %v426, 0.0
    %429 = vadd.xlane.f32.xlu0 %v428
    %v430 = vpop.xlane.xlu0 %429
    %v431 = vsel %vm331, %v427, 0.0
    %432 = vadd.xlane.f32.xlu0 %v431
    %v433 = vpop.xlane.xlu0 %432
    %v434 = vld [vmem:[#allocation2] sm:$0x1]
    %v436 = vlaneseq
    %v437 = vshrl.u32 %v436, 7
    %v438 = vsub.s32 0, %v437
    %v439 = vrot.slane %v434, %v438
    %v441 = vmul.f32 %v296, %v439
    %v442 = vmul.f32 %v301, %v439
    %v443 = vsel %vm331, %v441, 0.0
    %444 = vadd.xlane.f32.xlu0 %v443
    %v445 = vpop.xlane.xlu0 %444
    %v446 = vsel %vm331, %v442, 0.0
    %447 = vadd.xlane.f32.xlu0 %v446
    %v448 = vpop.xlane.xlu0 %447
    %v449 = vadd.f32 %v430, %v445
    %v450 = vadd.f32 %v433, %v448
    %vm451 = vcmp.gt.f32.partialorder %v449, 0.0
    %vm452 = vcmp.gt.f32.partialorder %v450, 0.0
    %v453 = vmul.f32 %v449, 0.01
    %v454 = vmul.f32 %v450, 0.01
    %v455 = vsel %vm451, %v449, %v453
    %v456 = vsel %vm452, %v450, %v454
    %v457 = vmax.f32 %v455, %v456
    %v458 = vrot.slane %v457, 4
    %v459 = vmax.f32 %v457, %v458
    %v460 = vrot.slane %v459, 2
    %v461 = vmax.f32 %v459, %v460
    %v462 = vrot.slane %v461, 1
    %v463 = vmax.f32 %v461, %v462
    %s464 = vtos %v463
    %v465 = vstv %s464
    %v466 = vsub.f32 %v455, %v465
    %v467 = vsub.f32 %v456, %v465
    %v468 = vmul.f32 %v466, 1.442695
    %v469 = vpow.pop %v468
    %v470 = vmul.f32 %v467, 1.442695
    %v471 = vpow.pop %v470
    %472 = vxpose.xlu0.b32.start [1/16] %v180, 128
    %473 = vxpose.xlu0.b32.cont [2/16] %v181, 128
    %474 = vxpose.xlu0.b32.cont [3/16] 0.0, 128
    %475 = vxpose.xlu0.b32.cont [4/16] 0.0, 128
    %476 = vxpose.xlu0.b32.cont [5/16] 0.0, 128
    %477 = vxpose.xlu0.b32.cont [6/16] 0.0, 128
    %478 = vxpose.xlu0.b32.cont [7/16] 0.0, 128
    %479 = vxpose.xlu0.b32.cont [8/16] 0.0, 128
    %480 = vxpose.xlu0.b32.cont [9/16] 0.0, 128
    %481 = vxpose.xlu0.b32.cont [10/16] 0.0, 128
    %482 = vxpose.xlu0.b32.cont [11/16] 0.0, 128
    %483 = vxpose.xlu0.b32.cont [12/16] 0.0, 128
    %484 = vxpose.xlu0.b32.cont [13/16] 0.0, 128
    %485 = vxpose.xlu0.b32.cont [14/16] 0.0, 128
    %486 = vxpose.xlu0.b32.cont [15/16] 0.0, 128
    %487 = vxpose.xlu0.b32.end [16/16] 0.0, 128
    %v488 = vpop.trf.xlu0
    %v489 = vpop.trf.xlu0
    %v490 = vpop.trf.xlu0
    %v491 = vpop.trf.xlu0
    %v492 = vpop.trf.xlu0
    %v493 = vpop.trf.xlu0
    %v494 = vpop.trf.xlu0
    %v495 = vpop.trf.xlu0
    %v496 = vpop.trf.xlu0
    %v497 = vpop.trf.xlu0
    %v498 = vpop.trf.xlu0
    %v499 = vpop.trf.xlu0
    %v500 = vpop.trf.xlu0
    %v501 = vpop.trf.xlu0
    %v502 = vpop.trf.xlu0
    %v503 = vpop.trf.xlu0
    %vm504 = vcmask 130048
    %v506 = vsel %vm504, %v488, 0
    %508 = vmatprep.subr.mxu0 0.0
    %509 = vmatpush1.msra.mxu0 0.0
    %510 = vmatprep.subr.mxu0 0.0
    %511 = vmatpush1.msra.mxu0 0.0
    %512 = vmatprep.subr.mxu0 0.0
    %513 = vmatpush1.msra.mxu0 0.0
    %514 = vmatprep.subr.mxu0 0.0
    %515 = vmatpush1.msra.mxu0 0.0
    %516 = vmatprep.subr.mxu0 0.0
    %517 = vmatpush1.msra.mxu0 0.0
    %518 = vmatprep.subr.mxu0 0.0
    %519 = vmatpush1.msra.mxu0 0.0
    %520 = vmatprep.subr.mxu0 0.0
    %521 = vmatpush1.msra.mxu0 0.0
    %522 = vmatprep.subr.mxu0 0.0
    %523 = vmatpush1.msra.mxu0 0.0
    %524 = vmatprep.subr.mxu0 0.0
    %525 = vmatpush1.msra.mxu0 0.0
    %526 = vmatprep.subr.mxu0 0.0
    %527 = vmatpush1.msra.mxu0 0.0
    %528 = vmatprep.subr.mxu0 0.0
    %529 = vmatpush1.msra.mxu0 0.0
    %530 = vmatprep.subr.mxu0 0.0
    %531 = vmatpush1.msra.mxu0 0.0
    %532 = vmatprep.subr.mxu0 0.0
    %533 = vmatpush1.msra.mxu0 0.0
    %534 = vmatprep.subr.mxu0 0.0
    %535 = vmatpush1.msra.mxu0 0.0
    %536 = vmatprep.subr.mxu0 0.0
    %537 = vmatpush1.msra.mxu0 %v471
    %538 = vmatprep.subr.mxu0 0.0
    %539 = vmatpush1.msra.mxu0 %v469
    %540 = vmatprep.subr.mxu0 0.0
    %541 = vmatpush2.msra.mxu0 0.0
    %542 = vmatprep.subr.mxu0 0.0
    %543 = vmatpush2.msra.mxu0 0.0
    %544 = vmatprep.subr.mxu0 0.0
    %545 = vmatpush2.msra.mxu0 0.0
    %546 = vmatprep.subr.mxu0 0.0
    %547 = vmatpush2.msra.mxu0 0.0
    %548 = vmatprep.subr.mxu0 0.0
    %549 = vmatpush2.msra.mxu0 0.0
    %550 = vmatprep.subr.mxu0 0.0
    %551 = vmatpush2.msra.mxu0 0.0
    %552 = vmatprep.subr.mxu0 0.0
    %553 = vmatpush2.msra.mxu0 0.0
    %554 = vmatprep.subr.mxu0 0.0
    %555 = vmatpush2.msra.mxu0 0.0
    %556 = vmatprep.subr.mxu0 0.0
    %557 = vmatpush2.msra.mxu0 0.0
    %558 = vmatprep.subr.mxu0 0.0
    %559 = vmatpush2.msra.mxu0 0.0
    %560 = vmatprep.subr.mxu0 0.0
    %561 = vmatpush2.msra.mxu0 0.0
    %562 = vmatprep.subr.mxu0 0.0
    %563 = vmatpush2.msra.mxu0 0.0
    %564 = vmatprep.subr.mxu0 0.0
    %565 = vmatpush2.msra.mxu0 0.0
    %566 = vmatprep.subr.mxu0 0.0
    %567 = vmatpush2.msra.mxu0 0.0
    %568 = vmatprep.subr.mxu0 0.0
    %569 = vmatpush2.msra.mxu0 0.0
    %570 = vmatprep.subr.mxu0 0.0
    %571 = vmatpush2.msra.mxu0 0.0
    %572 = vmatprep.mubr.f32.mxu0 0.0
    %573 = vmatmul.mubr.f32.gmra.mxu0 %v506
    %v574 = vpop.f32.mrf.mxu0
    %v575 = vadd.f32 0.0, %v574
    %v576 = vpop.f32.mrf.mxu0
    %577 = vdwg.mxu0
    %578 = vmatprep.subr.mxu0 0.0
    %579 = vmatpush1.msra.mxu0 0.0
    %580 = vmatprep.subr.mxu0 0.0
    %581 = vmatpush1.msra.mxu0 0.0
    %582 = vmatprep.subr.mxu0 0.0
    %583 = vmatpush1.msra.mxu0 0.0
    %584 = vmatprep.subr.mxu0 0.0
    %585 = vmatpush1.msra.mxu0 0.0
    %586 = vmatprep.subr.mxu0 0.0
    %587 = vmatpush1.msra.mxu0 0.0
    %588 = vmatprep.subr.mxu0 0.0
    %589 = vmatpush1.msra.mxu0 0.0
    %590 = vmatprep.subr.mxu0 0.0
    %591 = vmatpush1.msra.mxu0 0.0
    %592 = vmatprep.subr.mxu0 0.0
    %593 = vmatpush1.msra.mxu0 0.0
    %594 = vmatprep.subr.mxu0 0.0
    %595 = vmatpush1.msra.mxu0 0.0
    %596 = vmatprep.subr.mxu0 0.0
    %597 = vmatpush1.msra.mxu0 0.0
    %598 = vmatprep.subr.mxu0 0.0
    %599 = vmatpush1.msra.mxu0 0.0
    %600 = vmatprep.subr.mxu0 0.0
    %601 = vmatpush1.msra.mxu0 0.0
    %602 = vmatprep.subr.mxu0 0.0
    %603 = vmatpush1.msra.mxu0 0.0
    %604 = vmatprep.subr.mxu0 0.0
    %605 = vmatpush1.msra.mxu0 0.0
    %606 = vmatprep.subr.mxu0 0.0
    %607 = vmatpush1.msra.mxu0 0.0
    %608 = vmatprep.subr.mxu0 0.0
    %609 = vmatpush1.msra.mxu0 %v575
    %610 = vmatprep.subr.mxu0 0.0
    %611 = vmatpush2.msra.mxu0 0.0
    %612 = vmatprep.subr.mxu0 0.0
    %613 = vmatpush2.msra.mxu0 0.0
    %614 = vmatprep.subr.mxu0 0.0
    %615 = vmatpush2.msra.mxu0 0.0
    %616 = vmatprep.subr.mxu0 0.0
    %617 = vmatpush2.msra.mxu0 0.0
    %618 = vmatprep.subr.mxu0 0.0
    %619 = vmatpush2.msra.mxu0 0.0
    %620 = vmatprep.subr.mxu0 0.0
    %621 = vmatpush2.msra.mxu0 0.0
    %622 = vmatprep.subr.mxu0 0.0
    %623 = vmatpush2.msra.mxu0 0.0
    %624 = vmatprep.subr.mxu0 0.0
    %625 = vmatpush2.msra.mxu0 0.0
    %626 = vmatprep.subr.mxu0 0.0
    %627 = vmatpush2.msra.mxu0 0.0
    %628 = vmatprep.subr.mxu0 0.0
    %629 = vmatpush2.msra.mxu0 0.0
    %630 = vmatprep.subr.mxu0 0.0
    %631 = vmatpush2.msra.mxu0 0.0
    %632 = vmatprep.subr.mxu0 0.0
    %633 = vmatpush2.msra.mxu0 0.0
    %634 = vmatprep.subr.mxu0 0.0
    %635 = vmatpush2.msra.mxu0 0.0
    %636 = vmatprep.subr.mxu0 0.0
    %637 = vmatpush2.msra.mxu0 0.0
    %638 = vmatprep.subr.mxu0 0.0
    %639 = vmatpush2.msra.mxu0 0.0
    %640 = vmatprep.subr.mxu0 0.0
    %641 = vmatpush2.msra.mxu0 0.0
    %642 = vmatprep.mubr.f32.mxu0 0.0
    %643 = vmatmul.mubr.f32.gmra.mxu0 %v214
    %v644 = vpop.f32.mrf.mxu0
    %v645 = vadd.f32 1e-16, %v644
    %v646 = vpop.f32.mrf.mxu0
    %647 = vmatprep.mubr.f32.mxu0 0.0
    %648 = vmatmul.mubr.f32.gmra.mxu0 %v217
    %v649 = vpop.f32.mrf.mxu0
    %v650 = vadd.f32 1e-16, %v649
    %v651 = vpop.f32.mrf.mxu0
    %652 = vdwg.mxu0
    %v653 = vrcp.pop %v645
    %v654 = vmul.f32 %v469, %v653
    %v655 = vrcp.pop %v650
    %v656 = vmul.f32 %v471, %v655
    %v657 = vld [vmem:[#allocation5] sm:$0xff]
    %v658 = vld [vmem:[#allocation5 + $0x8] sm:$0xff]
    %v659 = vld [vmem:[#allocation5 + $0x10] sm:$0xff]
    %v660 = vld [vmem:[#allocation5 + $0x18] sm:$0xff]
    %v661 = vld [vmem:[#allocation5 + $0x20] sm:$0xff]
    %v662 = vld [vmem:[#allocation5 + $0x28] sm:$0xff]
    %v663 = vld [vmem:[#allocation5 + $0x30] sm:$0xff]
    %v664 = vld [vmem:[#allocation5 + $0x38] sm:$0xff]
    %v666 = vsel %vm331, %v417, 0
    %v669 = vsel %vm331, %v418, 0
    %671 = vmatprep.subr.mxu0 0.0
    %672 = vmatpush1.msra.mxu0 0.0
    %673 = vmatprep.subr.mxu0 0.0
    %674 = vmatpush1.msra.mxu0 0.0
    %675 = vmatprep.subr.mxu0 0.0
    %676 = vmatpush1.msra.mxu0 0.0
    %677 = vmatprep.subr.mxu0 0.0
    %678 = vmatpush1.msra.mxu0 0.0
    %679 = vmatprep.subr.mxu0 0.0
    %680 = vmatpush1.msra.mxu0 0.0
    %681 = vmatprep.subr.mxu0 0.0
    %682 = vmatpush1.msra.mxu0 0.0
    %683 = vmatprep.subr.mxu0 0.0
    %684 = vmatpush1.msra.mxu0 0.0
    %685 = vmatprep.subr.mxu0 0.0
    %686 = vmatpush1.msra.mxu0 0.0
    %687 = vmatprep.subr.mxu0 0.0
    %688 = vmatpush1.msra.mxu0 %v664
    %689 = vmatprep.subr.mxu0 0.0
    %690 = vmatpush1.msra.mxu0 %v663
    %691 = vmatprep.subr.mxu0 0.0
    %692 = vmatpush1.msra.mxu0 %v662
    %693 = vmatprep.subr.mxu0 0.0
    %694 = vmatpush1.msra.mxu0 %v661
    %695 = vmatprep.subr.mxu0 0.0
    %696 = vmatpush1.msra.mxu0 %v660
    %697 = vmatprep.subr.mxu0 0.0
    %698 = vmatpush1.msra.mxu0 %v659
    %699 = vmatprep.subr.mxu0 0.0
    %700 = vmatpush1.msra.mxu0 %v658
    %701 = vmatprep.subr.mxu0 0.0
    %702 = vmatpush1.msra.mxu0 %v657
    %703 = vmatprep.subr.mxu0 0.0
    %704 = vmatpush2.msra.mxu0 0.0
    %705 = vmatprep.subr.mxu0 0.0
    %706 = vmatpush2.msra.mxu0 0.0
    %707 = vmatprep.subr.mxu0 0.0
    %708 = vmatpush2.msra.mxu0 0.0
    %709 = vmatprep.subr.mxu0 0.0
    %710 = vmatpush2.msra.mxu0 0.0
    %711 = vmatprep.subr.mxu0 0.0
    %712 = vmatpush2.msra.mxu0 0.0
    %713 = vmatprep.subr.mxu0 0.0
    %714 = vmatpush2.msra.mxu0 0.0
    %715 = vmatprep.subr.mxu0 0.0
    %716 = vmatpush2.msra.mxu0 0.0
    %717 = vmatprep.subr.mxu0 0.0
    %718 = vmatpush2.msra.mxu0 0.0
    %719 = vmatprep.subr.mxu0 0.0
    %720 = vmatpush2.msra.mxu0 0.0
    %721 = vmatprep.subr.mxu0 0.0
    %722 = vmatpush2.msra.mxu0 0.0
    %723 = vmatprep.subr.mxu0 0.0
    %724 = vmatpush2.msra.mxu0 0.0
    %725 = vmatprep.subr.mxu0 0.0
    %726 = vmatpush2.msra.mxu0 0.0
    %727 = vmatprep.subr.mxu0 0.0
    %728 = vmatpush2.msra.mxu0 0.0
    %729 = vmatprep.subr.mxu0 0.0
    %730 = vmatpush2.msra.mxu0 0.0
    %731 = vmatprep.subr.mxu0 0.0
    %732 = vmatpush2.msra.mxu0 0.0
    %733 = vmatprep.subr.mxu0 0.0
    %734 = vmatpush2.msra.mxu0 0.0
    %735 = vmatprep.mubr.f32.mxu0 0.0
    %736 = vmatmul.mubr.f32.gmra.mxu0 %v666
    %v737 = vpop.f32.mrf.mxu0
    %v738 = vadd.f32 0.0, %v737
    %v739 = vpop.f32.mrf.mxu0
    %740 = vmatprep.mubr.f32.mxu0 0.0
    %741 = vmatmul.mubr.f32.gmra.mxu0 %v669
    %v742 = vpop.f32.mrf.mxu0
    %v743 = vadd.f32 0.0, %v742
    %v744 = vpop.f32.mrf.mxu0
    %745 = vdwg.mxu0
    %747 = vset.pattern.permute.xlu0 0
    %748 = vperm.xlu0 %747, %v654
    %v749 = vpop.permute.xlu0 %748
    %752 = vset.pattern.permute.xlu0 0
    %753 = vperm.xlu0 %752, %v656
    %v754 = vpop.permute.xlu0 %753
    %v756 = vmul.f32 %v738, %v749
    %v757 = vmul.f32 %v743, %v754
    %v758 = vld [vmem:[%s10] sm:$0x1]
    %v760 = vlaneseq
    %v761 = vshrl.u32 %v760, 7
    %v762 = vsub.s32 0, %v761
    %v763 = vrot.slane %v758, %v762
    %765 = vmatprep.subr.mxu0 0.0
    %766 = vmatpush1.msra.mxu0 0.0
    %767 = vmatprep.subr.mxu0 0.0
    %768 = vmatpush1.msra.mxu0 0.0
    %769 = vmatprep.subr.mxu0 0.0
    %770 = vmatpush1.msra.mxu0 0.0
    %771 = vmatprep.subr.mxu0 0.0
    %772 = vmatpush1.msra.mxu0 0.0
    %773 = vmatprep.subr.mxu0 0.0
    %774 = vmatpush1.msra.mxu0 0.0
    %775 = vmatprep.subr.mxu0 0.0
    %776 = vmatpush1.msra.mxu0 0.0
    %777 = vmatprep.subr.mxu0 0.0
    %778 = vmatpush1.msra.mxu0 0.0
    %779 = vmatprep.subr.mxu0 0.0
    %780 = vmatpush1.msra.mxu0 0.0
    %781 = vmatprep.subr.mxu0 0.0
    %782 = vmatpush1.msra.mxu0 0.0
    %783 = vmatprep.subr.mxu0 0.0
    %784 = vmatpush1.msra.mxu0 0.0
    %785 = vmatprep.subr.mxu0 0.0
    %786 = vmatpush1.msra.mxu0 0.0
    %787 = vmatprep.subr.mxu0 0.0
    %788 = vmatpush1.msra.mxu0 0.0
    %789 = vmatprep.subr.mxu0 0.0
    %790 = vmatpush1.msra.mxu0 0.0
    %791 = vmatprep.subr.mxu0 0.0
    %792 = vmatpush1.msra.mxu0 0.0
    %793 = vmatprep.subr.mxu0 0.0
    %794 = vmatpush1.msra.mxu0 %v757
    %795 = vmatprep.subr.mxu0 0.0
    %796 = vmatpush1.msra.mxu0 %v756
    %797 = vmatprep.subr.mxu0 0.0
    %798 = vmatpush2.msra.mxu0 0.0
    %799 = vmatprep.subr.mxu0 0.0
    %800 = vmatpush2.msra.mxu0 0.0
    %801 = vmatprep.subr.mxu0 0.0
    %802 = vmatpush2.msra.mxu0 0.0
    %803 = vmatprep.subr.mxu0 0.0
    %804 = vmatpush2.msra.mxu0 0.0
    %805 = vmatprep.subr.mxu0 0.0
    %806 = vmatpush2.msra.mxu0 0.0
    %807 = vmatprep.subr.mxu0 0.0
    %808 = vmatpush2.msra.mxu0 0.0
    %809 = vmatprep.subr.mxu0 0.0
    %810 = vmatpush2.msra.mxu0 0.0
    %811 = vmatprep.subr.mxu0 0.0
    %812 = vmatpush2.msra.mxu0 0.0
    %813 = vmatprep.subr.mxu0 0.0
    %814 = vmatpush2.msra.mxu0 0.0
    %815 = vmatprep.subr.mxu0 0.0
    %816 = vmatpush2.msra.mxu0 0.0
    %817 = vmatprep.subr.mxu0 0.0
    %818 = vmatpush2.msra.mxu0 0.0
    %819 = vmatprep.subr.mxu0 0.0
    %820 = vmatpush2.msra.mxu0 0.0
    %821 = vmatprep.subr.mxu0 0.0
    %822 = vmatpush2.msra.mxu0 0.0
    %823 = vmatprep.subr.mxu0 0.0
    %824 = vmatpush2.msra.mxu0 0.0
    %825 = vmatprep.subr.mxu0 0.0
    %826 = vmatpush2.msra.mxu0 0.0
    %827 = vmatprep.subr.mxu0 0.0
    %828 = vmatpush2.msra.mxu0 0.0
    %829 = vmatprep.mubr.f32.mxu0 0.0
    %830 = vmatmul.mubr.f32.gmra.mxu0 %v506
    %v831 = vpop.f32.mrf.mxu0
    %v832 = vadd.f32 %v763, %v831
    %v833 = vpop.f32.mrf.mxu0
    %834 = vdwg.mxu0
    %vm835 = vcmp.gt.f32.partialorder %v832, 0.0
    %v836 = vmin.f32 %v832, 0.0
    %v837 = vmul.f32 %v836, 1.442695
    %v838 = vpow.pop %v837
    %v839 = vsub.f32 %v838, 1.0
    %v840 = vsel %vm835, %v832, %v839
    %v841 = vld [vmem:[#allocation7] sm:$0xff]
    %v842 = vld [vmem:[#allocation7 + $0x8] sm:$0xff]
    %v843 = vld [vmem:[#allocation7 + $0x10] sm:$0xff]
    %v844 = vld [vmem:[#allocation7 + $0x18] sm:$0xff]
    %v845 = vld [vmem:[#allocation7 + $0x20] sm:$0xff]
    %v846 = vld [vmem:[#allocation7 + $0x28] sm:$0xff]
    %v847 = vld [vmem:[#allocation7 + $0x30] sm:$0xff]
    %v848 = vld [vmem:[#allocation7 + $0x38] sm:$0xff]
    %v849 = vld [vmem:[#allocation7 + $0x40] sm:$0xff]
    %v850 = vld [vmem:[#allocation7 + $0x48] sm:$0xff]
    %v851 = vld [vmem:[#allocation7 + $0x50] sm:$0xff]
    %v852 = vld [vmem:[#allocation7 + $0x58] sm:$0xff]
    %v853 = vld [vmem:[#allocation7 + $0x60] sm:$0xff]
    %v854 = vld [vmem:[#allocation7 + $0x68] sm:$0xff]
    %v855 = vld [vmem:[#allocation7 + $0x70] sm:$0xff]
    %v856 = vld [vmem:[#allocation7 + $0x78] sm:$0xff]
    %v857 = vld [vmem:[#allocation7 + $0x80] sm:$0xff]
    %v858 = vld [vmem:[#allocation7 + $0x88] sm:$0xff]
    %v859 = vld [vmem:[#allocation7 + $0x90] sm:$0xff]
    %v860 = vld [vmem:[#allocation7 + $0x98] sm:$0xff]
    %v861 = vld [vmem:[#allocation7 + $0xa0] sm:$0xff]
    %v862 = vld [vmem:[#allocation7 + $0xa8] sm:$0xff]
    %v863 = vld [vmem:[#allocation7 + $0xb0] sm:$0xff]
    %v864 = vld [vmem:[#allocation7 + $0xb8] sm:$0xff]
    %v865 = vld [vmem:[#allocation7 + $0xc0] sm:$0xff]
    %v866 = vld [vmem:[#allocation7 + $0xc8] sm:$0xff]
    %v867 = vld [vmem:[#allocation7 + $0xd0] sm:$0xff]
    %v868 = vld [vmem:[#allocation7 + $0xd8] sm:$0xff]
    %v869 = vld [vmem:[#allocation7 + $0xe0] sm:$0xff]
    %v870 = vld [vmem:[#allocation7 + $0xe8] sm:$0xff]
    %v871 = vld [vmem:[#allocation7 + $0xf0] sm:$0xff]
    %v872 = vld [vmem:[#allocation7 + $0xf8] sm:$0xff]
    %v873 = vld [vmem:[%s12] sm:$0x3]
    %875 = vrot.lane.b32.xlu0 %v205, 64
    %v876 = vpop.permute.xlu0 %875
    %v878 = vsel %vm331, %v840, %v876
    %v880 = vlaneseq
    %v881 = vshrl.u32 %v880, 7
    %v882 = vsub.s32 0, %v881
    %v883 = vrot.slane %v873, %v882
    %v884 = vlaneseq
    %v885 = vshrl.u32 %v884, 7
    %v886 = vsub.s32 1, %v885
    %v887 = vrot.slane %v873, %v886
    %890 = vmatprep.subr.mxu0 %v872
    %891 = vmatpush1.msra.mxu0 %v871
    %892 = vmatprep.subr.mxu0 %v870
    %893 = vmatpush1.msra.mxu0 %v869
    %894 = vmatprep.subr.mxu0 %v868
    %895 = vmatpush1.msra.mxu0 %v867
    %896 = vmatprep.subr.mxu0 %v866
    %897 = vmatpush1.msra.mxu0 %v865
    %898 = vmatprep.subr.mxu0 %v864
    %899 = vmatpush1.msra.mxu0 %v863
    %900 = vmatprep.subr.mxu0 %v862
    %901 = vmatpush1.msra.mxu0 %v861
    %902 = vmatprep.subr.mxu0 %v860
    %903 = vmatpush1.msra.mxu0 %v859
    %904 = vmatprep.subr.mxu0 %v858
    %905 = vmatpush1.msra.mxu0 %v857
    %906 = vmatprep.subr.mxu0 %v856
    %907 = vmatpush1.msra.mxu0 %v855
    %908 = vmatprep.subr.mxu0 %v854
    %909 = vmatpush1.msra.mxu0 %v853
    %910 = vmatprep.subr.mxu0 %v852
    %911 = vmatpush1.msra.mxu0 %v851
    %912 = vmatprep.subr.mxu0 %v850
    %913 = vmatpush1.msra.mxu0 %v849
    %914 = vmatprep.subr.mxu0 %v848
    %915 = vmatpush1.msra.mxu0 %v847
    %916 = vmatprep.subr.mxu0 %v846
    %917 = vmatpush1.msra.mxu0 %v845
    %918 = vmatprep.subr.mxu0 %v844
    %919 = vmatpush1.msra.mxu0 %v843
    %920 = vmatprep.subr.mxu0 %v842
    %921 = vmatpush1.msra.mxu0 %v841
    %922 = vmatprep.subr.mxu0 0.0
    %923 = vmatpush2.msra.mxu0 0.0
    %924 = vmatprep.subr.mxu0 0.0
    %925 = vmatpush2.msra.mxu0 0.0
    %926 = vmatprep.subr.mxu0 0.0
    %927 = vmatpush2.msra.mxu0 0.0
    %928 = vmatprep.subr.mxu0 0.0
    %929 = vmatpush2.msra.mxu0 0.0
    %930 = vmatprep.subr.mxu0 0.0
    %931 = vmatpush2.msra.mxu0 0.0
    %932 = vmatprep.subr.mxu0 0.0
    %933 = vmatpush2.msra.mxu0 0.0
    %934 = vmatprep.subr.mxu0 0.0
    %935 = vmatpush2.msra.mxu0 0.0
    %936 = vmatprep.subr.mxu0 0.0
    %937 = vmatpush2.msra.mxu0 0.0
    %938 = vmatprep.subr.mxu0 0.0
    %939 = vmatpush2.msra.mxu0 0.0
    %940 = vmatprep.subr.mxu0 0.0
    %941 = vmatpush2.msra.mxu0 0.0
    %942 = vmatprep.subr.mxu0 0.0
    %943 = vmatpush2.msra.mxu0 0.0
    %944 = vmatprep.subr.mxu0 0.0
    %945 = vmatpush2.msra.mxu0 0.0
    %946 = vmatprep.subr.mxu0 0.0
    %947 = vmatpush2.msra.mxu0 0.0
    %948 = vmatprep.subr.mxu0 0.0
    %949 = vmatpush2.msra.mxu0 0.0
    %950 = vmatprep.subr.mxu0 0.0
    %951 = vmatpush2.msra.mxu0 0.0
    %952 = vmatprep.subr.mxu0 0.0
    %953 = vmatpush2.msra.mxu0 0.0
    %954 = vmatprep.mubr.f32.mxu0 0.0
    %955 = vmatmul.mubr.f32.gmra.mxu0 %v878
    %v956 = vpop.f32.mrf.mxu0
    %v957 = vadd.f32 %v883, %v956
    %v958 = vpop.f32.mrf.mxu0
    %v959 = vadd.f32 %v887, %v958
    %960 = vdwg.mxu0
    %v961 = vsub.f32 0.0, %v957
    %v962 = vmul.f32 %v961, 1.442695
    %v963 = vpow.pop %v962
    %v964 = vadd.f32 %v963, 1.0
    %v965 = vrcp.pop %v964
    %v966 = vmul.f32 1.0, %v965
    %968 = vrot.lane.b32.xlu0 %v959, 64
    %v969 = vpop.permute.xlu0 %968
    %v971 = vmul.f32 %v966, %v969
    %v972 = vadd.f32 %v959, %v971
    %v973 = vtanh.pop %v972
    %v974 = vsub.f32 1.0, %v966
    %976 = vrot.lane.b32.xlu0 %v973, 64
    %v977 = vpop.permute.xlu0 %976
    %v979 = vmul.f32 %v974, %v977
    %v980 = vmul.f32 %v966, %v876
    %v981 = vadd.f32 %v979, %v980
    %v982 = vmax.f32 %v981, 0.0
    %vm983 = vcmask 1048064
    %v984 = vsel %vm983, %v982, 0.0
    %v985 = vrot.slane %v984, 4
    %v986 = vadd.f32 %v984, %v985
    %v987 = vrot.slane %v986, 2
    %v988 = vadd.f32 %v986, %v987
    %v989 = vrot.slane %v988, 1
    %v990 = vadd.f32 %v988, %v989
    %v991 = vmax.f32 %v990, 0.0
    %v992 = vld [vmem:[#allocation8] sm:$0xff]
    %v993 = vld [vmem:[#allocation8 + $0x8] sm:$0xff]
    %v994 = vld [vmem:[#allocation8 + $0x10] sm:$0xff]
    %v995 = vld [vmem:[#allocation8 + $0x18] sm:$0xff]
    %v996 = vld [vmem:[#allocation8 + $0x20] sm:$0xff]
    %v997 = vld [vmem:[#allocation8 + $0x28] sm:$0xff]
    %v998 = vld [vmem:[#allocation8 + $0x30] sm:$0xff]
    %v999 = vld [vmem:[#allocation8 + $0x38] sm:$0xff]
    %1002 = vrot.lane.b32.xlu0 %v982, 64
    %v1003 = vpop.permute.xlu0 %1002
    %1004 = vrot.lane.b32.xlu0 %v991, 64
    %v1005 = vpop.permute.xlu0 %1004
    %v1006 = vsel %vm331, %v1003, 0
    %v1008 = vsel %vm331, %v1005, 0
    %1010 = vmatprep.subr.mxu0 0.0
    %1011 = vmatpush1.msra.mxu0 0.0
    %1012 = vmatprep.subr.mxu0 0.0
    %1013 = vmatpush1.msra.mxu0 0.0
    %1014 = vmatprep.subr.mxu0 0.0
    %1015 = vmatpush1.msra.mxu0 0.0
    %1016 = vmatprep.subr.mxu0 0.0
    %1017 = vmatpush1.msra.mxu0 0.0
    %1018 = vmatprep.subr.mxu0 0.0
    %1019 = vmatpush1.msra.mxu0 0.0
    %1020 = vmatprep.subr.mxu0 0.0
    %1021 = vmatpush1.msra.mxu0 0.0
    %1022 = vmatprep.subr.mxu0 0.0
    %1023 = vmatpush1.msra.mxu0 0.0
    %1024 = vmatprep.subr.mxu0 0.0
    %1025 = vmatpush1.msra.mxu0 0.0
    %1026 = vmatprep.subr.mxu0 0.0
    %1027 = vmatpush1.msra.mxu0 %v999
    %1028 = vmatprep.subr.mxu0 0.0
    %1029 = vmatpush1.msra.mxu0 %v998
    %1030 = vmatprep.subr.mxu0 0.0
    %1031 = vmatpush1.msra.mxu0 %v997
    %1032 = vmatprep.subr.mxu0 0.0
    %1033 = vmatpush1.msra.mxu0 %v996
    %1034 = vmatprep.subr.mxu0 0.0
    %1035 = vmatpush1.msra.mxu0 %v995
    %1036 = vmatprep.subr.mxu0 0.0
    %1037 = vmatpush1.msra.mxu0 %v994
    %1038 = vmatprep.subr.mxu0 0.0
    %1039 = vmatpush1.msra.mxu0 %v993
    %1040 = vmatprep.subr.mxu0 0.0
    %1041 = vmatpush1.msra.mxu0 %v992
    %1042 = vmatprep.subr.mxu0 0.0
    %1043 = vmatpush2.msra.mxu0 0.0
    %1044 = vmatprep.subr.mxu0 0.0
    %1045 = vmatpush2.msra.mxu0 0.0
    %1046 = vmatprep.subr.mxu0 0.0
    %1047 = vmatpush2.msra.mxu0 0.0
    %1048 = vmatprep.subr.mxu0 0.0
    %1049 = vmatpush2.msra.mxu0 0.0
    %1050 = vmatprep.subr.mxu0 0.0
    %1051 = vmatpush2.msra.mxu0 0.0
    %1052 = vmatprep.subr.mxu0 0.0
    %1053 = vmatpush2.msra.mxu0 0.0
    %1054 = vmatprep.subr.mxu0 0.0
    %1055 = vmatpush2.msra.mxu0 0.0
    %1056 = vmatprep.subr.mxu0 0.0
    %1057 = vmatpush2.msra.mxu0 0.0
    %1058 = vmatprep.subr.mxu0 0.0
    %1059 = vmatpush2.msra.mxu0 0.0
    %1060 = vmatprep.subr.mxu0 0.0
    %1061 = vmatpush2.msra.mxu0 0.0
    %1062 = vmatprep.subr.mxu0 0.0
    %1063 = vmatpush2.msra.mxu0 0.0
    %1064 = vmatprep.subr.mxu0 0.0
    %1065 = vmatpush2.msra.mxu0 0.0
    %1066 = vmatprep.subr.mxu0 0.0
    %1067 = vmatpush2.msra.mxu0 0.0
    %1068 = vmatprep.subr.mxu0 0.0
    %1069 = vmatpush2.msra.mxu0 0.0
    %1070 = vmatprep.subr.mxu0 0.0
    %1071 = vmatpush2.msra.mxu0 0.0
    %1072 = vmatprep.subr.mxu0 0.0
    %1073 = vmatpush2.msra.mxu0 0.0
    %1074 = vmatprep.mubr.f32.mxu0 0.0
    %1075 = vmatmul.mubr.f32.gmra.mxu0 %v1006
    %v1076 = vpop.f32.mrf.mxu0
    %v1077 = vadd.f32 0.0, %v1076
    %v1078 = vpop.f32.mrf.mxu0
    %1079 = vmatprep.mubr.f32.mxu0 0.0
    %1080 = vmatmul.mubr.f32.gmra.mxu0 %v1008
    %v1081 = vpop.f32.mrf.mxu0
    %v1082 = vadd.f32 0.0, %v1081
    %v1083 = vpop.f32.mrf.mxu0
    %1084 = vdwg.mxu0
    %v1085 = vld [vmem:[%s14] sm:$0x1]
    %v1087 = vlaneseq
    %v1088 = vshrl.u32 %v1087, 7
    %v1089 = vsub.s32 0, %v1088
    %v1090 = vrot.slane %v1085, %v1089
    %v1092 = vmul.f32 %v1077, %v1090
    %v1093 = vsel %vm331, %v1092, 0.0
    %1094 = vadd.xlane.f32.xlu0 %v1093
    %v1095 = vpop.xlane.xlu0 %1094
    %v1096 = vld [vmem:[%s15] sm:$0x1]
    %v1097 = vmul.f32 %v1082, %v1096
    %vm1098 = vcmask 516096
    %v1099 = vsel %vm1098, %v1097, 0.0
    %1100 = vadd.xlane.f32.xlu0 %v1099
    %v1101 = vpop.xlane.xlu0 %1100
    %v1102 = vlaneseq
    %v1103 = vshrl.u32 %v1102, 7
    %v1104 = vsub.s32 0, %v1103
    %v1105 = vrot.slane %v1101, %v1104
    %v1106 = vadd.f32 %v1095, %v1105
    %vm1107 = vcmp.gt.f32.partialorder %v1106, 0.0
    %v1108 = vmul.f32 %v1106, 0.01
    %v1109 = vsel %vm1107, %v1106, %v1108
    %v1110 = vrot.slane %v1109, 4
    %v1111 = vmax.f32 %v1109, %v1110
    %v1112 = vrot.slane %v1111, 2
    %v1113 = vmax.f32 %v1111, %v1112
    %v1114 = vrot.slane %v1113, 1
    %v1115 = vmax.f32 %v1113, %v1114
    %s1116 = vtos %v1115
    %v1117 = vstv %s1116
    %v1118 = vsub.f32 %v1109, %v1117
    %v1119 = vmul.f32 %v1118, 1.442695
    %v1120 = vpow.pop %v1119
    %vm1121 = vcmask 7168
    %v1122 = vsel %vm1121, %v1120, 0.0
    %1123 = vadd.xlane.f32.xlu0 %v1122
    %v1124 = vpop.xlane.xlu0 %1123
    %v1125 = vrot.slane %v1124, 4
    %v1126 = vadd.f32 %v1124, %v1125
    %v1127 = vrot.slane %v1126, 2
    %v1128 = vadd.f32 %v1126, %v1127
    %v1129 = vrot.slane %v1128, 1
    %v1130 = vadd.f32 %v1128, %v1129
    %s1131 = vtos %v1130
    %s1132 = sadd.f32 %s1131, 1e-16
    %v1133 = vstv %s1132
    %v1134 = vrcp.pop %v1133
    %v1135 = vmul.f32 %v1120, %v1134
    %v1136 = vmul.f32 %v1135, %v1077
    %v1137 = vsel %vm331, %v1136, 0.0
    %v1138 = vrot.slane %v1137, 4
    %v1139 = vadd.f32 %v1137, %v1138
    %v1140 = vrot.slane %v1139, 2
    %v1141 = vadd.f32 %v1139, %v1140
    %v1142 = vrot.slane %v1141, 1
    %v1143 = vadd.f32 %v1141, %v1142
    %v1144 = vld [vmem:[%s16] sm:$0x1]
    %v1145 = vadd.f32 %v1143, %v1144
    %vm1146 = vcmp.gt.f32.partialorder %v1145, 0.0
    %v1147 = vmin.f32 %v1145, 0.0
    %v1148 = vmul.f32 %v1147, 1.442695
    %v1149 = vpow.pop %v1148
    %v1150 = vsub.f32 %v1149, 1.0
    %v1151 = vsel %vm1146, %v1145, %v1150
    %v1152 = vld [vmem:[#allocation10] sm:$0xff]
    %v1153 = vld [vmem:[#allocation10 + $0x8] sm:$0xff]
    %v1154 = vld [vmem:[#allocation10 + $0x10] sm:$0xff]
    %v1155 = vld [vmem:[#allocation10 + $0x18] sm:$0xff]
    %v1156 = vld [vmem:[#allocation10 + $0x20] sm:$0xff]
    %v1157 = vld [vmem:[#allocation10 + $0x28] sm:$0xff]
    %v1158 = vld [vmem:[#allocation10 + $0x30] sm:$0xff]
    %v1159 = vld [vmem:[#allocation10 + $0x38] sm:$0xff]
    %v1160 = vld [vmem:[#allocation10 + $0x40] sm:$0xff]
    %v1161 = vld [vmem:[#allocation10 + $0x48] sm:$0xff]
    %v1162 = vld [vmem:[#allocation10 + $0x50] sm:$0xff]
    %v1163 = vld [vmem:[#allocation10 + $0x58] sm:$0xff]
    %v1164 = vld [vmem:[#allocation10 + $0x60] sm:$0xff]
    %v1165 = vld [vmem:[#allocation10 + $0x68] sm:$0xff]
    %v1166 = vld [vmem:[#allocation10 + $0x70] sm:$0xff]
    %v1167 = vld [vmem:[#allocation10 + $0x78] sm:$0xff]
    %v1168 = vld [vmem:[#allocation10 + $0x80] sm:$0xff]
    %v1169 = vld [vmem:[#allocation10 + $0x88] sm:$0xff]
    %v1170 = vld [vmem:[#allocation10 + $0x90] sm:$0xff]
    %v1171 = vld [vmem:[#allocation10 + $0x98] sm:$0xff]
    %v1172 = vld [vmem:[#allocation10 + $0xa0] sm:$0xff]
    %v1173 = vld [vmem:[#allocation10 + $0xa8] sm:$0xff]
    %v1174 = vld [vmem:[#allocation10 + $0xb0] sm:$0xff]
    %v1175 = vld [vmem:[#allocation10 + $0xb8] sm:$0xff]
    %v1176 = vld [vmem:[#allocation10 + $0xc0] sm:$0xff]
    %v1177 = vld [vmem:[#allocation10 + $0xc8] sm:$0xff]
    %v1178 = vld [vmem:[#allocation10 + $0xd0] sm:$0xff]
    %v1179 = vld [vmem:[#allocation10 + $0xd8] sm:$0xff]
    %v1180 = vld [vmem:[#allocation10 + $0xe0] sm:$0xff]
    %v1181 = vld [vmem:[#allocation10 + $0xe8] sm:$0xff]
    %v1182 = vld [vmem:[#allocation10 + $0xf0] sm:$0xff]
    %v1183 = vld [vmem:[#allocation10 + $0xf8] sm:$0xff]
    %v1184 = vld [vmem:[%s18] sm:$0x3]
    %v1185 = vsel %vm331, %v1151, %v991
    %v1187 = vlaneseq
    %v1188 = vshrl.u32 %v1187, 7
    %v1189 = vsub.s32 0, %v1188
    %v1190 = vrot.slane %v1184, %v1189
    %v1191 = vlaneseq
    %v1192 = vshrl.u32 %v1191, 7
    %v1193 = vsub.s32 1, %v1192
    %v1194 = vrot.slane %v1184, %v1193
    %1197 = vmatprep.subr.mxu0 %v1183
    %1198 = vmatpush1.msra.mxu0 %v1182
    %1199 = vmatprep.subr.mxu0 %v1181
    %1200 = vmatpush1.msra.mxu0 %v1180
    %1201 = vmatprep.subr.mxu0 %v1179
    %1202 = vmatpush1.msra.mxu0 %v1178
    %1203 = vmatprep.subr.mxu0 %v1177
    %1204 = vmatpush1.msra.mxu0 %v1176
    %1205 = vmatprep.subr.mxu0 %v1175
    %1206 = vmatpush1.msra.mxu0 %v1174
    %1207 = vmatprep.subr.mxu0 %v1173
    %1208 = vmatpush1.msra.mxu0 %v1172
    %1209 = vmatprep.subr.mxu0 %v1171
    %1210 = vmatpush1.msra.mxu0 %v1170
    %1211 = vmatprep.subr.mxu0 %v1169
    %1212 = vmatpush1.msra.mxu0 %v1168
    %1213 = vmatprep.subr.mxu0 %v1167
    %1214 = vmatpush1.msra.mxu0 %v1166
    %1215 = vmatprep.subr.mxu0 %v1165
    %1216 = vmatpush1.msra.mxu0 %v1164
    %1217 = vmatprep.subr.mxu0 %v1163
    %1218 = vmatpush1.msra.mxu0 %v1162
    %1219 = vmatprep.subr.mxu0 %v1161
    %1220 = vmatpush1.msra.mxu0 %v1160
    %1221 = vmatprep.subr.mxu0 %v1159
    %1222 = vmatpush1.msra.mxu0 %v1158
    %1223 = vmatprep.subr.mxu0 %v1157
    %1224 = vmatpush1.msra.mxu0 %v1156
    %1225 = vmatprep.subr.mxu0 %v1155
    %1226 = vmatpush1.msra.mxu0 %v1154
    %1227 = vmatprep.subr.mxu0 %v1153
    %1228 = vmatpush1.msra.mxu0 %v1152
    %1229 = vmatprep.subr.mxu0 0.0
    %1230 = vmatpush2.msra.mxu0 0.0
    %1231 = vmatprep.subr.mxu0 0.0
    %1232 = vmatpush2.msra.mxu0 0.0
    %1233 = vmatprep.subr.mxu0 0.0
    %1234 = vmatpush2.msra.mxu0 0.0
    %1235 = vmatprep.subr.mxu0 0.0
    %1236 = vmatpush2.msra.mxu0 0.0
    %1237 = vmatprep.subr.mxu0 0.0
    %1238 = vmatpush2.msra.mxu0 0.0
    %1239 = vmatprep.subr.mxu0 0.0
    %1240 = vmatpush2.msra.mxu0 0.0
    %1241 = vmatprep.subr.mxu0 0.0
    %1242 = vmatpush2.msra.mxu0 0.0
    %1243 = vmatprep.subr.mxu0 0.0
    %1244 = vmatpush2.msra.mxu0 0.0
    %1245 = vmatprep.subr.mxu0 0.0
    %1246 = vmatpush2.msra.mxu0 0.0
    %1247 = vmatprep.subr.mxu0 0.0
    %1248 = vmatpush2.msra.mxu0 0.0
    %1249 = vmatprep.subr.mxu0 0.0
    %1250 = vmatpush2.msra.mxu0 0.0
    %1251 = vmatprep.subr.mxu0 0.0
    %1252 = vmatpush2.msra.mxu0 0.0
    %1253 = vmatprep.subr.mxu0 0.0
    %1254 = vmatpush2.msra.mxu0 0.0
    %1255 = vmatprep.subr.mxu0 0.0
    %1256 = vmatpush2.msra.mxu0 0.0
    %1257 = vmatprep.subr.mxu0 0.0
    %1258 = vmatpush2.msra.mxu0 0.0
    %1259 = vmatprep.subr.mxu0 0.0
    %1260 = vmatpush2.msra.mxu0 0.0
    %1261 = vmatprep.mubr.f32.mxu0 0.0
    %1262 = vmatmul.mubr.f32.gmra.mxu0 %v1185
    %v1263 = vpop.f32.mrf.mxu0
    %v1264 = vadd.f32 %v1190, %v1263
    %v1265 = vpop.f32.mrf.mxu0
    %v1266 = vadd.f32 %v1194, %v1265
    %1267 = vdwg.mxu0
    %v1268 = vsub.f32 0.0, %v1264
    %v1269 = vmul.f32 %v1268, 1.442695
    %v1270 = vpow.pop %v1269
    %v1271 = vadd.f32 %v1270, 1.0
    %v1272 = vrcp.pop %v1271
    %v1273 = vmul.f32 1.0, %v1272
    %1275 = vrot.lane.b32.xlu0 %v1266, 64
    %v1276 = vpop.permute.xlu0 %1275
    %v1278 = vmul.f32 %v1273, %v1276
    %v1279 = vadd.f32 %v1266, %v1278
    %v1280 = vtanh.pop %v1279
    %v1281 = vsub.f32 1.0, %v1273
    %1283 = vrot.lane.b32.xlu0 %v1280, 64
    %v1284 = vpop.permute.xlu0 %1283
    %v1286 = vmul.f32 %v1281, %v1284
    %v1287 = vmul.f32 %v1273, %v991
    %v1288 = vadd.f32 %v1286, %v1287
    %v1289 = vmax.f32 %v1288, 0.0
    %v1290 = vld [vmem:[#allocation11] sm:$0xff]
    %v1291 = vld [vmem:[#allocation11 + $0x8] sm:$0xff]
    %v1292 = vld [vmem:[#allocation11 + $0x10] sm:$0xff]
    %v1293 = vld [vmem:[#allocation11 + $0x18] sm:$0xff]
    %v1294 = vld [vmem:[#allocation11 + $0x20] sm:$0xff]
    %v1295 = vld [vmem:[#allocation11 + $0x28] sm:$0xff]
    %v1296 = vld [vmem:[#allocation11 + $0x30] sm:$0xff]
    %v1297 = vld [vmem:[#allocation11 + $0x38] sm:$0xff]
    %v1298 = vld [vmem:[%s20] sm:$0x1]
    %1300 = vrot.lane.b32.xlu0 %v1289, 64
    %v1301 = vpop.permute.xlu0 %1300
    %v1302 = vsel %vm331, %v1301, 0
    %1304 = vmatprep.subr.mxu0 0.0
    %1305 = vmatpush1.msra.mxu0 0.0
    %1306 = vmatprep.subr.mxu0 0.0
    %1307 = vmatpush1.msra.mxu0 0.0
    %1308 = vmatprep.subr.mxu0 0.0
    %1309 = vmatpush1.msra.mxu0 0.0
    %1310 = vmatprep.subr.mxu0 0.0
    %1311 = vmatpush1.msra.mxu0 0.0
    %1312 = vmatprep.subr.mxu0 0.0
    %1313 = vmatpush1.msra.mxu0 0.0
    %1314 = vmatprep.subr.mxu0 0.0
    %1315 = vmatpush1.msra.mxu0 0.0
    %1316 = vmatprep.subr.mxu0 0.0
    %1317 = vmatpush1.msra.mxu0 0.0
    %1318 = vmatprep.subr.mxu0 0.0
    %1319 = vmatpush1.msra.mxu0 0.0
    %1320 = vmatprep.subr.mxu0 0.0
    %1321 = vmatpush1.msra.mxu0 %v1297
    %1322 = vmatprep.subr.mxu0 0.0
    %1323 = vmatpush1.msra.mxu0 %v1296
    %1324 = vmatprep.subr.mxu0 0.0
    %1325 = vmatpush1.msra.mxu0 %v1295
    %1326 = vmatprep.subr.mxu0 0.0
    %1327 = vmatpush1.msra.mxu0 %v1294
    %1328 = vmatprep.subr.mxu0 0.0
    %1329 = vmatpush1.msra.mxu0 %v1293
    %1330 = vmatprep.subr.mxu0 0.0
    %1331 = vmatpush1.msra.mxu0 %v1292
    %1332 = vmatprep.subr.mxu0 0.0
    %1333 = vmatpush1.msra.mxu0 %v1291
    %1334 = vmatprep.subr.mxu0 0.0
    %1335 = vmatpush1.msra.mxu0 %v1290
    %1336 = vmatprep.subr.mxu0 0.0
    %1337 = vmatpush2.msra.mxu0 0.0
    %1338 = vmatprep.subr.mxu0 0.0
    %1339 = vmatpush2.msra.mxu0 0.0
    %1340 = vmatprep.subr.mxu0 0.0
    %1341 = vmatpush2.msra.mxu0 0.0
    %1342 = vmatprep.subr.mxu0 0.0
    %1343 = vmatpush2.msra.mxu0 0.0
    %1344 = vmatprep.subr.mxu0 0.0
    %1345 = vmatpush2.msra.mxu0 0.0
    %1346 = vmatprep.subr.mxu0 0.0
    %1347 = vmatpush2.msra.mxu0 0.0
    %1348 = vmatprep.subr.mxu0 0.0
    %1349 = vmatpush2.msra.mxu0 0.0
    %1350 = vmatprep.subr.mxu0 0.0
    %1351 = vmatpush2.msra.mxu0 0.0
    %1352 = vmatprep.subr.mxu0 0.0
    %1353 = vmatpush2.msra.mxu0 0.0
    %1354 = vmatprep.subr.mxu0 0.0
    %1355 = vmatpush2.msra.mxu0 0.0
    %1356 = vmatprep.subr.mxu0 0.0
    %1357 = vmatpush2.msra.mxu0 0.0
    %1358 = vmatprep.subr.mxu0 0.0
    %1359 = vmatpush2.msra.mxu0 0.0
    %1360 = vmatprep.subr.mxu0 0.0
    %1361 = vmatpush2.msra.mxu0 0.0
    %1362 = vmatprep.subr.mxu0 0.0
    %1363 = vmatpush2.msra.mxu0 0.0
    %1364 = vmatprep.subr.mxu0 0.0
    %1365 = vmatpush2.msra.mxu0 0.0
    %1366 = vmatprep.subr.mxu0 0.0
    %1367 = vmatpush2.msra.mxu0 0.0
    %1368 = vmatprep.mubr.f32.mxu0 0.0
    %1369 = vmatmul.mubr.f32.gmra.mxu0 %v1302
    %v1370 = vpop.f32.mrf.mxu0
    %v1371 = vadd.f32 %v1298, %v1370
    %v1372 = vpop.f32.mrf.mxu0
    %1373 = vdwg.mxu0
    %1374 = vst.msk [vmem:[#allocation13] sm:$0x1] %vm1098, %v1371
    // Predicated region
    $region110: #{tpu_custom_call.1} parent=1 // pred_check
      _
    $region111: #{tpu_custom_call.1} parent=1 // pred_check_branch
      %1376 = sbr.rel (0) target = $region113
    $region112: #{tpu_custom_call.1} parent=1 // pred_region
      %s1378 = ssub.s32 16, 16
      %1379 = vsyncadd [#allocation4], %s1378
      %s1381 = sshll.u32 [#allocation13], 4
      %s1382 = int_to_ptr.vmem [resolvable:$true] %s1381
      %1384 = dma.vmem_to_hbm [thread:$0]  %s1382, 16, %s21, [#allocation4]
    $region113: #{tpu_custom_call.1} parent=1 // pred_fallthru
      _
    // Predicated region
    $region114: #{tpu_custom_call.1} parent=1 // pred_check
      _
    $region115: #{tpu_custom_call.1} parent=1 // pred_check_branch
      %1386 = sbr.rel (0) target = $region117
    $region116: #{tpu_custom_call.1} parent=1 // pred_region
      %1387 = dma.done [#allocation4], 16
    $region117: #{tpu_custom_call.1} parent=1 // pred_fallthru
      _
    %1388 = vsyncpa [#allocation3], 1
    %1389 = vsyncpa [#allocation6], 1
    %1390 = vsyncpa [#allocation9], 1
    %1391 = vsyncpa [#allocation12], 1
    %1392 = vsyncpa [#allocation4], 1

</llo_original>
